<compile_context>
chip_gen: v7x
topology: tpu7x:2x2x1
jax: 0.10.0
libtpu: 0.0.40
codegen_flags: <defaults>
</compile_context>

<pallas_src>
import jax
import jax.numpy as jnp
from jax.experimental import pallas as pl
from jax.experimental.pallas import tpu as pltpu


# ----------------------------- Pallas kernel -------------------------------

def make_fused_lstm_kernel(T, n_layer):
    """Builds the fused kernel for a fixed (static) T and n_layer.

    Ref order: x_tm, [wih_t, whh_t, bias] * n_layer, mask, cls_w_t, cls_b,
               out_ref, gx_scratch
    """

    def kernel(*refs):
        x_ref = refs[0]
        layer_refs = refs[1:1 + 3 * n_layer]
        mask_ref, clsw_ref, clsb_ref, out_ref, gx_scr = refs[1 + 3 * n_layer:]

        B = mask_ref.shape[0]

        # ---- Layer 0 input projection, hoisted over the full sequence --------
        # (T*B, D) @ (D, 4H) -> (T*B, 4H); one MXU call off the serial path.
        gx0 = (jnp.dot(x_ref[...], layer_refs[0][...],
                       preferred_element_type=jnp.float32)
               + layer_refs[2][...])

        last_h = None
        for layer in range(n_layer):
            # Hoisted weight loads: read once per layer, not once per timestep.
            whh = layer_refs[3 * layer + 1][...]              # (H, 4H) bf16
            H = whh.shape[0]
            fuse_next = layer + 1 < n_layer
            if fuse_next:
                wih_next = layer_refs[3 * (layer + 1) + 0][...]   # (H, 4H) bf16
                b_next = layer_refs[3 * (layer + 1) + 2][...]     # (1, 4H) f32

            h = jnp.zeros((B, H), jnp.float32)
            c = jnp.zeros((B, H), jnp.float32)

            # Fully-unrolled recurrence (T is small & static); only h @ W_hh is
            # on the serial dependency chain.
            for t in range(T):
                # Pre-activation input term: value slice for layer 0, otherwise the
                # lane-dense (B, 4H) rows the previous layer's loop already wrote
                # (bias included).
                if layer == 0:
                    gx_t = gx0[t * B:(t + 1) * B, :]
                else:
                    gx_t = gx_scr[t * B:(t + 1) * B, :]

                gates = gx_t + jnp.dot(h.astype(jnp.bfloat16), whh,
                                       preferred_element_type=jnp.float32)

                # Two full-width EUP passes, then narrow gate slices.
                # PyTorch gate order: i, f, g, o.
                sg = jax.nn.sigmoid(gates)
                tg = jnp.tanh(gates)
                i = sg[:, 0 * H:1 * H]
                f = sg[:, 1 * H:2 * H]
                g = tg[:, 2 * H:3 * H]
                o = sg[:, 3 * H:4 * H]

                c = f * c + i * g
                h = o * jnp.tanh(c)

                if fuse_next:
                    # Fused next-layer input projection: overlaps with this layer's
                    # gate math and makes the scratch store a full-128-lane vst.
                    gx_scr[t * B:(t + 1) * B, :] = (
                        jnp.dot(h.astype(jnp.bfloat16), wih_next,
                                preferred_element_type=jnp.float32)
                        + b_next)

            last_h = h                                   # (B, H) hidden at t = T-1

        # pad_packed_sequence zero-pads positions >= length, so out[:, -1, :] is the
        # final hidden state only for full-length sequences, zero otherwise.
        # TODO(synk): per-timestep packed-sequence freezing of (h, c) for short
        # sequences is not implemented; it is not needed for the out[:, -1, :] +
        # classifier readout this module returns.
        masked = last_h * mask_ref[...]                  # (B, H) * (B, 1)

        # Classifier with lane-padded (H, C_pad) weight -> lane-dense output store.
        out_ref[...] = (jnp.dot(masked.astype(jnp.bfloat16), clsw_ref[...],
                                preferred_element_type=jnp.float32)
                        + clsb_ref[...])

    return kernel


# ------------------------------ Wrapper -------------------------------------

def lstm_forward(x, x_lengths, params, n_class):
    """Full module forward (model_type='standard').

    x: (B, T, in_dim) batch-first float32
    x_lengths: (B,) int32, sorted descending, max == T
    n_class: static Python int (number of real classes; classifier is lane-padded).
    """
    B, T, D = x.shape
    layers = params["layers"]
    n_layer = len(layers)
    H = layers[0][1].shape[0]
    C_pad = params["cls_w_t"].shape[1]

    # Glue (plain XLA): batch-first -> time-major (T*B, D); bf16 MXU operand.
    x_tm = jnp.transpose(x, (1, 0, 2)).reshape(T * B, D).astype(jnp.bfloat16)
    # out[:, -1, :] is nonzero only for full-length sequences.
    mask = (x_lengths >= T).astype(jnp.float32)[:, None]          # (B, 1)

    flat_layer_args = []
    for (wih_t, whh_t, bias) in layers:
        flat_layer_args += [wih_t, whh_t, bias]

    inputs = (x_tm, *flat_layer_args, mask, params["cls_w_t"], params["cls_b"])

    # Explicit VMEM residency for every operand + an explicit scoped-VMEM budget
    # derived from the actual footprint (v7x: 64 MiB physical; v5e default: 16 MiB).
    vmem_spec = pl.BlockSpec(memory_space=pltpu.MemorySpace.VMEM)
    footprint = sum(int(a.size) * a.dtype.itemsize for a in inputs)
    footprint += T * B * 4 * H * 4          # (T*B, 4H) f32 inter-layer gx scratch
    footprint += B * C_pad * 4              # padded output
    vmem_limit = int(min(64 * 2**20, max(16 * 2**20, 4 * footprint)))

    kernel = make_fused_lstm_kernel(T, n_layer)
    out_padded = pl.pallas_call(
        kernel,
        out_shape=jax.ShapeDtypeStruct((B, C_pad), jnp.float32),
        in_specs=[vmem_spec] * len(inputs),
        out_specs=vmem_spec,
        scratch_shapes=[pltpu.VMEM((T * B, 4 * H), jnp.float32)],
        compiler_params=pltpu.CompilerParams(vmem_limit_bytes=vmem_limit),
    )(*inputs)
    return out_padded[:, :n_class]


# ------------------------------ Param init ----------------------------------

def init_params(key, in_dim, hidden_dim, n_layer, n_class, lane=128):
    params = {"layers": []}
    bound = 1.0 / float(hidden_dim) ** 0.5
    for layer in range(n_layer):
        d_in = in_dim if layer == 0 else hidden_dim
        key, k1, k2, k3, k4 = jax.random.split(key, 5)
        w_ih = jax.random.uniform(k1, (4 * hidden_dim, d_in), jnp.float32, -bound, bound)
        w_hh = jax.random.uniform(k2, (4 * hidden_dim, hidden_dim), jnp.float32, -bound, bound)
        b_ih = jax.random.uniform(k3, (4 * hidden_dim,), jnp.float32, -bound, bound)
        b_hh = jax.random.uniform(k4, (4 * hidden_dim,), jnp.float32, -bound, bound)
        # Pre-transpose weights (x @ W^T form), pre-sum biases, bf16 MXU operands.
        params["layers"].append((w_ih.T.astype(jnp.bfloat16),
                                 w_hh.T.astype(jnp.bfloat16),
                                 (b_ih + b_hh)[None, :].astype(jnp.float32)))
    key, k5, k6 = jax.random.split(key, 3)
    cls_w = jax.random.uniform(k5, (n_class, hidden_dim), jnp.float32, -bound, bound)
    cls_b = jax.random.uniform(k6, (n_class,), jnp.float32, -bound, bound)
    # Lane-pad the classifier to a multiple of 128 output columns (zero padding) so
    # the kernel's final store is lane-dense; the wrapper slices back to n_class.
    c_pad = max(lane, ((n_class + lane - 1) // lane) * lane)
    cls_w_t = jnp.zeros((hidden_dim, c_pad), jnp.float32).at[:, :n_class].set(cls_w.T)
    cls_b_p = jnp.zeros((1, c_pad), jnp.float32).at[:, :n_class].set(cls_b[None, :])
    params["cls_w_t"] = cls_w_t.astype(jnp.bfloat16)
    params["cls_b"] = cls_b_p
    return params


# --------------------------------- Main --------------------------------------

if __name__ == "__main__":
    B, T, IN_DIM, HIDDEN, N_LAYER, N_CLASS = 8, 8, 16, 32, 2, 5

    key = jax.random.PRNGKey(0)
    key, kx = jax.random.split(key)
    x = jax.random.normal(kx, (B, T, IN_DIM), jnp.float32)
    # lengths sorted descending (pack_padded_sequence default enforce_sorted=True),
    # max length equals T so the padded output has T time steps.
    x_lengths = jnp.array([8, 7, 6, 6, 5, 4, 3, 2], dtype=jnp.int32)

    params = init_params(key, IN_DIM, HIDDEN, N_LAYER, N_CLASS)

    fwd = jax.jit(lstm_forward, static_argnums=3)
    logits = fwd(x, x_lengths, params, N_CLASS)
    jax.block_until_ready(logits)
    assert logits.shape == (B, N_CLASS)
    print("KERNEL_OK")
</pallas_src>

<mosaic_0001>
module attributes {stable_mosaic.version = 11 : i64} {
  func.func @kernel(%arg0: memref<64x16xbf16, #tpu.memory_space<vmem>>, %arg1: memref<16x128xbf16, #tpu.memory_space<vmem>>, %arg2: memref<32x128xbf16, #tpu.memory_space<vmem>>, %arg3: memref<1x128xf32, #tpu.memory_space<vmem>>, %arg4: memref<32x128xbf16, #tpu.memory_space<vmem>>, %arg5: memref<32x128xbf16, #tpu.memory_space<vmem>>, %arg6: memref<1x128xf32, #tpu.memory_space<vmem>>, %arg7: memref<8x1xf32, #tpu.memory_space<vmem>>, %arg8: memref<32x128xbf16, #tpu.memory_space<vmem>>, %arg9: memref<1x128xf32, #tpu.memory_space<vmem>>, %arg10: memref<8x128xf32, #tpu.memory_space<vmem>>, %arg11: memref<64x128xf32, #tpu.memory_space<vmem>>) attributes {dimension_semantics = [], scalar_prefetch = 0 : i64, scratch_operands = 1 : i64, tpu.core_type = #tpu.core_type<tc>} {
    %c0 = arith.constant 0 : index
    %c0_0 = arith.constant 0 : index
    %0 = vector.load %arg0[%c0, %c0_0] : memref<64x16xbf16, #tpu.memory_space<vmem>>, vector<64x16xbf16>
    %c0_1 = arith.constant 0 : index
    %c0_2 = arith.constant 0 : index
    %1 = vector.load %arg1[%c0_1, %c0_2] : memref<16x128xbf16, #tpu.memory_space<vmem>>, vector<16x128xbf16>
    %cst = arith.constant dense<0.000000e+00> : vector<64x128xf32>
    %2 = tpu.matmul %0, %1, %cst {dimension_numbers = #tpu.dot_dimension_numbers<[1], [0], [0], [1], [0, 0, 1, 1], [], []>} : vector<64x16xbf16>, vector<16x128xbf16>, vector<64x128xf32> -> vector<64x128xf32>
    %c0_3 = arith.constant 0 : index
    %c0_4 = arith.constant 0 : index
    %3 = vector.load %arg3[%c0_3, %c0_4] : memref<1x128xf32, #tpu.memory_space<vmem>>, vector<1x128xf32>
    %4 = vector.broadcast %3 : vector<1x128xf32> to vector<64x128xf32>
    %5 = arith.addf %2, %4 : vector<64x128xf32>
    %c0_5 = arith.constant 0 : index
    %c0_6 = arith.constant 0 : index
    %6 = vector.load %arg2[%c0_5, %c0_6] : memref<32x128xbf16, #tpu.memory_space<vmem>>, vector<32x128xbf16>
    %c0_7 = arith.constant 0 : index
    %c0_8 = arith.constant 0 : index
    %7 = vector.load %arg4[%c0_7, %c0_8] : memref<32x128xbf16, #tpu.memory_space<vmem>>, vector<32x128xbf16>
    %c0_9 = arith.constant 0 : index
    %c0_10 = arith.constant 0 : index
    %8 = vector.load %arg6[%c0_9, %c0_10] : memref<1x128xf32, #tpu.memory_space<vmem>>, vector<1x128xf32>
    %cst_11 = arith.constant 0.000000e+00 : f32
    %9 = vector.broadcast %cst_11 : f32 to vector<8x32xf32>
    %cst_12 = arith.constant 0.000000e+00 : f32
    %10 = vector.broadcast %cst_12 : f32 to vector<8x32xf32>
    %11 = vector.extract_strided_slice %5 {offsets = [0, 0], sizes = [8, 128], strides = [1, 1]} : vector<64x128xf32> to vector<8x128xf32>
    %12 = arith.truncf %9 : vector<8x32xf32> to vector<8x32xbf16>
    %cst_13 = arith.constant dense<0.000000e+00> : vector<8x128xf32>
    %13 = tpu.matmul %12, %6, %cst_13 {dimension_numbers = #tpu.dot_dimension_numbers<[1], [0], [0], [1], [0, 0, 1, 1], [], []>} : vector<8x32xbf16>, vector<32x128xbf16>, vector<8x128xf32> -> vector<8x128xf32>
    %14 = arith.addf %11, %13 : vector<8x128xf32>
    %15 = arith.negf %14 : vector<8x128xf32>
    %16 = math.exp %15 : vector<8x128xf32>
    %cst_14 = arith.constant 1.000000e+00 : f32
    %17 = vector.broadcast %cst_14 : f32 to vector<8x128xf32>
    %18 = arith.addf %17, %16 : vector<8x128xf32>
    %19 = arith.divf %17, %18 : vector<8x128xf32>
    %20 = math.tanh %14 : vector<8x128xf32>
    %21 = vector.extract_strided_slice %19 {offsets = [0, 0], sizes = [8, 32], strides = [1, 1]} : vector<8x128xf32> to vector<8x32xf32>
    %22 = vector.extract_strided_slice %19 {offsets = [0, 32], sizes = [8, 32], strides = [1, 1]} : vector<8x128xf32> to vector<8x32xf32>
    %23 = vector.extract_strided_slice %20 {offsets = [0, 64], sizes = [8, 32], strides = [1, 1]} : vector<8x128xf32> to vector<8x32xf32>
    %24 = vector.extract_strided_slice %19 {offsets = [0, 96], sizes = [8, 32], strides = [1, 1]} : vector<8x128xf32> to vector<8x32xf32>
    %25 = arith.mulf %22, %10 : vector<8x32xf32>
    %26 = arith.mulf %21, %23 : vector<8x32xf32>
    %27 = arith.addf %25, %26 : vector<8x32xf32>
    %28 = math.tanh %27 : vector<8x32xf32>
    %29 = arith.mulf %24, %28 : vector<8x32xf32>
    %30 = arith.truncf %29 : vector<8x32xf32> to vector<8x32xbf16>
    %cst_15 = arith.constant dense<0.000000e+00> : vector<8x128xf32>
    %31 = tpu.matmul %30, %7, %cst_15 {dimension_numbers = #tpu.dot_dimension_numbers<[1], [0], [0], [1], [0, 0, 1, 1], [], []>} : vector<8x32xbf16>, vector<32x128xbf16>, vector<8x128xf32> -> vector<8x128xf32>
    %32 = vector.broadcast %8 : vector<1x128xf32> to vector<8x128xf32>
    %33 = arith.addf %31, %32 : vector<8x128xf32>
    %c0_16 = arith.constant 0 : index
    %c0_17 = arith.constant 0 : index
    %34 = vector.load %arg11[%c0_16, %c0_17] : memref<64x128xf32, #tpu.memory_space<vmem>>, vector<8x128xf32>
    tpu.vector_store %arg11[%c0_16, %c0_17], %33 {strides = array<i32>} : memref<64x128xf32, #tpu.memory_space<vmem>>, vector<8x128xf32>,
    %35 = vector.extract_strided_slice %5 {offsets = [8, 0], sizes = [8, 128], strides = [1, 1]} : vector<64x128xf32> to vector<8x128xf32>
    %36 = arith.truncf %29 : vector<8x32xf32> to vector<8x32xbf16>
    %cst_18 = arith.constant dense<0.000000e+00> : vector<8x128xf32>
    %37 = tpu.matmul %36, %6, %cst_18 {dimension_numbers = #tpu.dot_dimension_numbers<[1], [0], [0], [1], [0, 0, 1, 1], [], []>} : vector<8x32xbf16>, vector<32x128xbf16>, vector<8x128xf32> -> vector<8x128xf32>
    %38 = arith.addf %35, %37 : vector<8x128xf32>
    %39 = arith.negf %38 : vector<8x128xf32>
    %40 = math.exp %39 : vector<8x128xf32>
    %cst_19 = arith.constant 1.000000e+00 : f32
    %41 = vector.broadcast %cst_19 : f32 to vector<8x128xf32>
    %42 = arith.addf %41, %40 : vector<8x128xf32>
    %43 = arith.divf %41, %42 : vector<8x128xf32>
    %44 = math.tanh %38 : vector<8x128xf32>
    %45 = vector.extract_strided_slice %43 {offsets = [0, 0], sizes = [8, 32], strides = [1, 1]} : vector<8x128xf32> to vector<8x32xf32>
    %46 = vector.extract_strided_slice %43 {offsets = [0, 32], sizes = [8, 32], strides = [1, 1]} : vector<8x128xf32> to vector<8x32xf32>
    %47 = vector.extract_strided_slice %44 {offsets = [0, 64], sizes = [8, 32], strides = [1, 1]} : vector<8x128xf32> to vector<8x32xf32>
    %48 = vector.extract_strided_slice %43 {offsets = [0, 96], sizes = [8, 32], strides = [1, 1]} : vector<8x128xf32> to vector<8x32xf32>
    %49 = arith.mulf %46, %27 : vector<8x32xf32>
    %50 = arith.mulf %45, %47 : vector<8x32xf32>
    %51 = arith.addf %49, %50 : vector<8x32xf32>
    %52 = math.tanh %51 : vector<8x32xf32>
    %53 = arith.mulf %48, %52 : vector<8x32xf32>
    %54 = arith.truncf %53 : vector<8x32xf32> to vector<8x32xbf16>
    %cst_20 = arith.constant dense<0.000000e+00> : vector<8x128xf32>
    %55 = tpu.matmul %54, %7, %cst_20 {dimension_numbers = #tpu.dot_dimension_numbers<[1], [0], [0], [1], [0, 0, 1, 1], [], []>} : vector<8x32xbf16>, vector<32x128xbf16>, vector<8x128xf32> -> vector<8x128xf32>
    %56 = vector.broadcast %8 : vector<1x128xf32> to vector<8x128xf32>
    %57 = arith.addf %55, %56 : vector<8x128xf32>
    %c8 = arith.constant 8 : index
    %c0_21 = arith.constant 0 : index
    %58 = vector.load %arg11[%c8, %c0_21] : memref<64x128xf32, #tpu.memory_space<vmem>>, vector<8x128xf32>
    tpu.vector_store %arg11[%c8, %c0_21], %57 {strides = array<i32>} : memref<64x128xf32, #tpu.memory_space<vmem>>, vector<8x128xf32>,
    %59 = vector.extract_strided_slice %5 {offsets = [16, 0], sizes = [8, 128], strides = [1, 1]} : vector<64x128xf32> to vector<8x128xf32>
    %60 = arith.truncf %53 : vector<8x32xf32> to vector<8x32xbf16>
    %cst_22 = arith.constant dense<0.000000e+00> : vector<8x128xf32>
    %61 = tpu.matmul %60, %6, %cst_22 {dimension_numbers = #tpu.dot_dimension_numbers<[1], [0], [0], [1], [0, 0, 1, 1], [], []>} : vector<8x32xbf16>, vector<32x128xbf16>, vector<8x128xf32> -> vector<8x128xf32>
    %62 = arith.addf %59, %61 : vector<8x128xf32>
    %63 = arith.negf %62 : vector<8x128xf32>
    %64 = math.exp %63 : vector<8x128xf32>
    %cst_23 = arith.constant 1.000000e+00 : f32
    %65 = vector.broadcast %cst_23 : f32 to vector<8x128xf32>
    %66 = arith.addf %65, %64 : vector<8x128xf32>
    %67 = arith.divf %65, %66 : vector<8x128xf32>
    %68 = math.tanh %62 : vector<8x128xf32>
    %69 = vector.extract_strided_slice %67 {offsets = [0, 0], sizes = [8, 32], strides = [1, 1]} : vector<8x128xf32> to vector<8x32xf32>
    %70 = vector.extract_strided_slice %67 {offsets = [0, 32], sizes = [8, 32], strides = [1, 1]} : vector<8x128xf32> to vector<8x32xf32>
    %71 = vector.extract_strided_slice %68 {offsets = [0, 64], sizes = [8, 32], strides = [1, 1]} : vector<8x128xf32> to vector<8x32xf32>
    %72 = vector.extract_strided_slice %67 {offsets = [0, 96], sizes = [8, 32], strides = [1, 1]} : vector<8x128xf32> to vector<8x32xf32>
    %73 = arith.mulf %70, %51 : vector<8x32xf32>
    %74 = arith.mulf %69, %71 : vector<8x32xf32>
    %75 = arith.addf %73, %74 : vector<8x32xf32>
    %76 = math.tanh %75 : vector<8x32xf32>
    %77 = arith.mulf %72, %76 : vector<8x32xf32>
    %78 = arith.truncf %77 : vector<8x32xf32> to vector<8x32xbf16>
    %cst_24 = arith.constant dense<0.000000e+00> : vector<8x128xf32>
    %79 = tpu.matmul %78, %7, %cst_24 {dimension_numbers = #tpu.dot_dimension_numbers<[1], [0], [0], [1], [0, 0, 1, 1], [], []>} : vector<8x32xbf16>, vector<32x128xbf16>, vector<8x128xf32> -> vector<8x128xf32>
    %80 = vector.broadcast %8 : vector<1x128xf32> to vector<8x128xf32>
    %81 = arith.addf %79, %80 : vector<8x128xf32>
    %c16 = arith.constant 16 : index
    %c0_25 = arith.constant 0 : index
    %82 = vector.load %arg11[%c16, %c0_25] : memref<64x128xf32, #tpu.memory_space<vmem>>, vector<8x128xf32>
    tpu.vector_store %arg11[%c16, %c0_25], %81 {strides = array<i32>} : memref<64x128xf32, #tpu.memory_space<vmem>>, vector<8x128xf32>,
    %83 = vector.extract_strided_slice %5 {offsets = [24, 0], sizes = [8, 128], strides = [1, 1]} : vector<64x128xf32> to vector<8x128xf32>
    %84 = arith.truncf %77 : vector<8x32xf32> to vector<8x32xbf16>
    %cst_26 = arith.constant dense<0.000000e+00> : vector<8x128xf32>
    %85 = tpu.matmul %84, %6, %cst_26 {dimension_numbers = #tpu.dot_dimension_numbers<[1], [0], [0], [1], [0, 0, 1, 1], [], []>} : vector<8x32xbf16>, vector<32x128xbf16>, vector<8x128xf32> -> vector<8x128xf32>
    %86 = arith.addf %83, %85 : vector<8x128xf32>
    %87 = arith.negf %86 : vector<8x128xf32>
    %88 = math.exp %87 : vector<8x128xf32>
    %cst_27 = arith.constant 1.000000e+00 : f32
    %89 = vector.broadcast %cst_27 : f32 to vector<8x128xf32>
    %90 = arith.addf %89, %88 : vector<8x128xf32>
    %91 = arith.divf %89, %90 : vector<8x128xf32>
    %92 = math.tanh %86 : vector<8x128xf32>
    %93 = vector.extract_strided_slice %91 {offsets = [0, 0], sizes = [8, 32], strides = [1, 1]} : vector<8x128xf32> to vector<8x32xf32>
    %94 = vector.extract_strided_slice %91 {offsets = [0, 32], sizes = [8, 32], strides = [1, 1]} : vector<8x128xf32> to vector<8x32xf32>
    %95 = vector.extract_strided_slice %92 {offsets = [0, 64], sizes = [8, 32], strides = [1, 1]} : vector<8x128xf32> to vector<8x32xf32>
    %96 = vector.extract_strided_slice %91 {offsets = [0, 96], sizes = [8, 32], strides = [1, 1]} : vector<8x128xf32> to vector<8x32xf32>
    %97 = arith.mulf %94, %75 : vector<8x32xf32>
    %98 = arith.mulf %93, %95 : vector<8x32xf32>
    %99 = arith.addf %97, %98 : vector<8x32xf32>
    %100 = math.tanh %99 : vector<8x32xf32>
    %101 = arith.mulf %96, %100 : vector<8x32xf32>
    %102 = arith.truncf %101 : vector<8x32xf32> to vector<8x32xbf16>
    %cst_28 = arith.constant dense<0.000000e+00> : vector<8x128xf32>
    %103 = tpu.matmul %102, %7, %cst_28 {dimension_numbers = #tpu.dot_dimension_numbers<[1], [0], [0], [1], [0, 0, 1, 1], [], []>} : vector<8x32xbf16>, vector<32x128xbf16>, vector<8x128xf32> -> vector<8x128xf32>
    %104 = vector.broadcast %8 : vector<1x128xf32> to vector<8x128xf32>
    %105 = arith.addf %103, %104 : vector<8x128xf32>
    %c24 = arith.constant 24 : index
    %c0_29 = arith.constant 0 : index
    %106 = vector.load %arg11[%c24, %c0_29] : memref<64x128xf32, #tpu.memory_space<vmem>>, vector<8x128xf32>
    tpu.vector_store %arg11[%c24, %c0_29], %105 {strides = array<i32>} : memref<64x128xf32, #tpu.memory_space<vmem>>, vector<8x128xf32>,
    %107 = vector.extract_strided_slice %5 {offsets = [32, 0], sizes = [8, 128], strides = [1, 1]} : vector<64x128xf32> to vector<8x128xf32>
    %108 = arith.truncf %101 : vector<8x32xf32> to vector<8x32xbf16>
    %cst_30 = arith.constant dense<0.000000e+00> : vector<8x128xf32>
    %109 = tpu.matmul %108, %6, %cst_30 {dimension_numbers = #tpu.dot_dimension_numbers<[1], [0], [0], [1], [0, 0, 1, 1], [], []>} : vector<8x32xbf16>, vector<32x128xbf16>, vector<8x128xf32> -> vector<8x128xf32>
    %110 = arith.addf %107, %109 : vector<8x128xf32>
    %111 = arith.negf %110 : vector<8x128xf32>
    %112 = math.exp %111 : vector<8x128xf32>
    %cst_31 = arith.constant 1.000000e+00 : f32
    %113 = vector.broadcast %cst_31 : f32 to vector<8x128xf32>
    %114 = arith.addf %113, %112 : vector<8x128xf32>
    %115 = arith.divf %113, %114 : vector<8x128xf32>
    %116 = math.tanh %110 : vector<8x128xf32>
    %117 = vector.extract_strided_slice %115 {offsets = [0, 0], sizes = [8, 32], strides = [1, 1]} : vector<8x128xf32> to vector<8x32xf32>
    %118 = vector.extract_strided_slice %115 {offsets = [0, 32], sizes = [8, 32], strides = [1, 1]} : vector<8x128xf32> to vector<8x32xf32>
    %119 = vector.extract_strided_slice %116 {offsets = [0, 64], sizes = [8, 32], strides = [1, 1]} : vector<8x128xf32> to vector<8x32xf32>
    %120 = vector.extract_strided_slice %115 {offsets = [0, 96], sizes = [8, 32], strides = [1, 1]} : vector<8x128xf32> to vector<8x32xf32>
    %121 = arith.mulf %118, %99 : vector<8x32xf32>
    %122 = arith.mulf %117, %119 : vector<8x32xf32>
    %123 = arith.addf %121, %122 : vector<8x32xf32>
    %124 = math.tanh %123 : vector<8x32xf32>
    %125 = arith.mulf %120, %124 : vector<8x32xf32>
    %126 = arith.truncf %125 : vector<8x32xf32> to vector<8x32xbf16>
    %cst_32 = arith.constant dense<0.000000e+00> : vector<8x128xf32>
    %127 = tpu.matmul %126, %7, %cst_32 {dimension_numbers = #tpu.dot_dimension_numbers<[1], [0], [0], [1], [0, 0, 1, 1], [], []>} : vector<8x32xbf16>, vector<32x128xbf16>, vector<8x128xf32> -> vector<8x128xf32>
    %128 = vector.broadcast %8 : vector<1x128xf32> to vector<8x128xf32>
    %129 = arith.addf %127, %128 : vector<8x128xf32>
    %c32 = arith.constant 32 : index
    %c0_33 = arith.constant 0 : index
    %130 = vector.load %arg11[%c32, %c0_33] : memref<64x128xf32, #tpu.memory_space<vmem>>, vector<8x128xf32>
    tpu.vector_store %arg11[%c32, %c0_33], %129 {strides = array<i32>} : memref<64x128xf32, #tpu.memory_space<vmem>>, vector<8x128xf32>,
    %131 = vector.extract_strided_slice %5 {offsets = [40, 0], sizes = [8, 128], strides = [1, 1]} : vector<64x128xf32> to vector<8x128xf32>
    %132 = arith.truncf %125 : vector<8x32xf32> to vector<8x32xbf16>
    %cst_34 = arith.constant dense<0.000000e+00> : vector<8x128xf32>
    %133 = tpu.matmul %132, %6, %cst_34 {dimension_numbers = #tpu.dot_dimension_numbers<[1], [0], [0], [1], [0, 0, 1, 1], [], []>} : vector<8x32xbf16>, vector<32x128xbf16>, vector<8x128xf32> -> vector<8x128xf32>
    %134 = arith.addf %131, %133 : vector<8x128xf32>
    %135 = arith.negf %134 : vector<8x128xf32>
    %136 = math.exp %135 : vector<8x128xf32>
    %cst_35 = arith.constant 1.000000e+00 : f32
    %137 = vector.broadcast %cst_35 : f32 to vector<8x128xf32>
    %138 = arith.addf %137, %136 : vector<8x128xf32>
    %139 = arith.divf %137, %138 : vector<8x128xf32>
    %140 = math.tanh %134 : vector<8x128xf32>
    %141 = vector.extract_strided_slice %139 {offsets = [0, 0], sizes = [8, 32], strides = [1, 1]} : vector<8x128xf32> to vector<8x32xf32>
    %142 = vector.extract_strided_slice %139 {offsets = [0, 32], sizes = [8, 32], strides = [1, 1]} : vector<8x128xf32> to vector<8x32xf32>
    %143 = vector.extract_strided_slice %140 {offsets = [0, 64], sizes = [8, 32], strides = [1, 1]} : vector<8x128xf32> to vector<8x32xf32>
    %144 = vector.extract_strided_slice %139 {offsets = [0, 96], sizes = [8, 32], strides = [1, 1]} : vector<8x128xf32> to vector<8x32xf32>
    %145 = arith.mulf %142, %123 : vector<8x32xf32>
    %146 = arith.mulf %141, %143 : vector<8x32xf32>
    %147 = arith.addf %145, %146 : vector<8x32xf32>
    %148 = math.tanh %147 : vector<8x32xf32>
    %149 = arith.mulf %144, %148 : vector<8x32xf32>
    %150 = arith.truncf %149 : vector<8x32xf32> to vector<8x32xbf16>
    %cst_36 = arith.constant dense<0.000000e+00> : vector<8x128xf32>
    %151 = tpu.matmul %150, %7, %cst_36 {dimension_numbers = #tpu.dot_dimension_numbers<[1], [0], [0], [1], [0, 0, 1, 1], [], []>} : vector<8x32xbf16>, vector<32x128xbf16>, vector<8x128xf32> -> vector<8x128xf32>
    %152 = vector.broadcast %8 : vector<1x128xf32> to vector<8x128xf32>
    %153 = arith.addf %151, %152 : vector<8x128xf32>
    %c40 = arith.constant 40 : index
    %c0_37 = arith.constant 0 : index
    %154 = vector.load %arg11[%c40, %c0_37] : memref<64x128xf32, #tpu.memory_space<vmem>>, vector<8x128xf32>
    tpu.vector_store %arg11[%c40, %c0_37], %153 {strides = array<i32>} : memref<64x128xf32, #tpu.memory_space<vmem>>, vector<8x128xf32>,
    %155 = vector.extract_strided_slice %5 {offsets = [48, 0], sizes = [8, 128], strides = [1, 1]} : vector<64x128xf32> to vector<8x128xf32>
    %156 = arith.truncf %149 : vector<8x32xf32> to vector<8x32xbf16>
    %cst_38 = arith.constant dense<0.000000e+00> : vector<8x128xf32>
    %157 = tpu.matmul %156, %6, %cst_38 {dimension_numbers = #tpu.dot_dimension_numbers<[1], [0], [0], [1], [0, 0, 1, 1], [], []>} : vector<8x32xbf16>, vector<32x128xbf16>, vector<8x128xf32> -> vector<8x128xf32>
    %158 = arith.addf %155, %157 : vector<8x128xf32>
    %159 = arith.negf %158 : vector<8x128xf32>
    %160 = math.exp %159 : vector<8x128xf32>
    %cst_39 = arith.constant 1.000000e+00 : f32
    %161 = vector.broadcast %cst_39 : f32 to vector<8x128xf32>
    %162 = arith.addf %161, %160 : vector<8x128xf32>
    %163 = arith.divf %161, %162 : vector<8x128xf32>
    %164 = math.tanh %158 : vector<8x128xf32>
    %165 = vector.extract_strided_slice %163 {offsets = [0, 0], sizes = [8, 32], strides = [1, 1]} : vector<8x128xf32> to vector<8x32xf32>
    %166 = vector.extract_strided_slice %163 {offsets = [0, 32], sizes = [8, 32], strides = [1, 1]} : vector<8x128xf32> to vector<8x32xf32>
    %167 = vector.extract_strided_slice %164 {offsets = [0, 64], sizes = [8, 32], strides = [1, 1]} : vector<8x128xf32> to vector<8x32xf32>
    %168 = vector.extract_strided_slice %163 {offsets = [0, 96], sizes = [8, 32], strides = [1, 1]} : vector<8x128xf32> to vector<8x32xf32>
    %169 = arith.mulf %166, %147 : vector<8x32xf32>
    %170 = arith.mulf %165, %167 : vector<8x32xf32>
    %171 = arith.addf %169, %170 : vector<8x32xf32>
    %172 = math.tanh %171 : vector<8x32xf32>
    %173 = arith.mulf %168, %172 : vector<8x32xf32>
    %174 = arith.truncf %173 : vector<8x32xf32> to vector<8x32xbf16>
    %cst_40 = arith.constant dense<0.000000e+00> : vector<8x128xf32>
    %175 = tpu.matmul %174, %7, %cst_40 {dimension_numbers = #tpu.dot_dimension_numbers<[1], [0], [0], [1], [0, 0, 1, 1], [], []>} : vector<8x32xbf16>, vector<32x128xbf16>, vector<8x128xf32> -> vector<8x128xf32>
    %176 = vector.broadcast %8 : vector<1x128xf32> to vector<8x128xf32>
    %177 = arith.addf %175, %176 : vector<8x128xf32>
    %c48 = arith.constant 48 : index
    %c0_41 = arith.constant 0 : index
    %178 = vector.load %arg11[%c48, %c0_41] : memref<64x128xf32, #tpu.memory_space<vmem>>, vector<8x128xf32>
    tpu.vector_store %arg11[%c48, %c0_41], %177 {strides = array<i32>} : memref<64x128xf32, #tpu.memory_space<vmem>>, vector<8x128xf32>,
    %179 = vector.extract_strided_slice %5 {offsets = [56, 0], sizes = [8, 128], strides = [1, 1]} : vector<64x128xf32> to vector<8x128xf32>
    %180 = arith.truncf %173 : vector<8x32xf32> to vector<8x32xbf16>
    %cst_42 = arith.constant dense<0.000000e+00> : vector<8x128xf32>
    %181 = tpu.matmul %180, %6, %cst_42 {dimension_numbers = #tpu.dot_dimension_numbers<[1], [0], [0], [1], [0, 0, 1, 1], [], []>} : vector<8x32xbf16>, vector<32x128xbf16>, vector<8x128xf32> -> vector<8x128xf32>
    %182 = arith.addf %179, %181 : vector<8x128xf32>
    %183 = arith.negf %182 : vector<8x128xf32>
    %184 = math.exp %183 : vector<8x128xf32>
    %cst_43 = arith.constant 1.000000e+00 : f32
    %185 = vector.broadcast %cst_43 : f32 to vector<8x128xf32>
    %186 = arith.addf %185, %184 : vector<8x128xf32>
    %187 = arith.divf %185, %186 : vector<8x128xf32>
    %188 = math.tanh %182 : vector<8x128xf32>
    %189 = vector.extract_strided_slice %187 {offsets = [0, 0], sizes = [8, 32], strides = [1, 1]} : vector<8x128xf32> to vector<8x32xf32>
    %190 = vector.extract_strided_slice %187 {offsets = [0, 32], sizes = [8, 32], strides = [1, 1]} : vector<8x128xf32> to vector<8x32xf32>
    %191 = vector.extract_strided_slice %188 {offsets = [0, 64], sizes = [8, 32], strides = [1, 1]} : vector<8x128xf32> to vector<8x32xf32>
    %192 = vector.extract_strided_slice %187 {offsets = [0, 96], sizes = [8, 32], strides = [1, 1]} : vector<8x128xf32> to vector<8x32xf32>
    %193 = arith.mulf %190, %171 : vector<8x32xf32>
    %194 = arith.mulf %189, %191 : vector<8x32xf32>
    %195 = arith.addf %193, %194 : vector<8x32xf32>
    %196 = math.tanh %195 : vector<8x32xf32>
    %197 = arith.mulf %192, %196 : vector<8x32xf32>
    %198 = arith.truncf %197 : vector<8x32xf32> to vector<8x32xbf16>
    %cst_44 = arith.constant dense<0.000000e+00> : vector<8x128xf32>
    %199 = tpu.matmul %198, %7, %cst_44 {dimension_numbers = #tpu.dot_dimension_numbers<[1], [0], [0], [1], [0, 0, 1, 1], [], []>} : vector<8x32xbf16>, vector<32x128xbf16>, vector<8x128xf32> -> vector<8x128xf32>
    %200 = vector.broadcast %8 : vector<1x128xf32> to vector<8x128xf32>
    %201 = arith.addf %199, %200 : vector<8x128xf32>
    %c56 = arith.constant 56 : index
    %c0_45 = arith.constant 0 : index
    %202 = vector.load %arg11[%c56, %c0_45] : memref<64x128xf32, #tpu.memory_space<vmem>>, vector<8x128xf32>
    tpu.vector_store %arg11[%c56, %c0_45], %201 {strides = array<i32>} : memref<64x128xf32, #tpu.memory_space<vmem>>, vector<8x128xf32>,
    %c0_46 = arith.constant 0 : index
    %c0_47 = arith.constant 0 : index
    %203 = vector.load %arg5[%c0_46, %c0_47] : memref<32x128xbf16, #tpu.memory_space<vmem>>, vector<32x128xbf16>
    %cst_48 = arith.constant 0.000000e+00 : f32
    %204 = vector.broadcast %cst_48 : f32 to vector<8x32xf32>
    %cst_49 = arith.constant 0.000000e+00 : f32
    %205 = vector.broadcast %cst_49 : f32 to vector<8x32xf32>
    %c0_50 = arith.constant 0 : index
    %c0_51 = arith.constant 0 : index
    %206 = vector.load %arg11[%c0_50, %c0_51] : memref<64x128xf32, #tpu.memory_space<vmem>>, vector<8x128xf32>
    %207 = arith.truncf %204 : vector<8x32xf32> to vector<8x32xbf16>
    %cst_52 = arith.constant dense<0.000000e+00> : vector<8x128xf32>
    %208 = tpu.matmul %207, %203, %cst_52 {dimension_numbers = #tpu.dot_dimension_numbers<[1], [0], [0], [1], [0, 0, 1, 1], [], []>} : vector<8x32xbf16>, vector<32x128xbf16>, vector<8x128xf32> -> vector<8x128xf32>
    %209 = arith.addf %206, %208 : vector<8x128xf32>
    %210 = arith.negf %209 : vector<8x128xf32>
    %211 = math.exp %210 : vector<8x128xf32>
    %cst_53 = arith.constant 1.000000e+00 : f32
    %212 = vector.broadcast %cst_53 : f32 to vector<8x128xf32>
    %213 = arith.addf %212, %211 : vector<8x128xf32>
    %214 = arith.divf %212, %213 : vector<8x128xf32>
    %215 = math.tanh %209 : vector<8x128xf32>
    %216 = vector.extract_strided_slice %214 {offsets = [0, 0], sizes = [8, 32], strides = [1, 1]} : vector<8x128xf32> to vector<8x32xf32>
    %217 = vector.extract_strided_slice %214 {offsets = [0, 32], sizes = [8, 32], strides = [1, 1]} : vector<8x128xf32> to vector<8x32xf32>
    %218 = vector.extract_strided_slice %215 {offsets = [0, 64], sizes = [8, 32], strides = [1, 1]} : vector<8x128xf32> to vector<8x32xf32>
    %219 = vector.extract_strided_slice %214 {offsets = [0, 96], sizes = [8, 32], strides = [1, 1]} : vector<8x128xf32> to vector<8x32xf32>
    %220 = arith.mulf %217, %205 : vector<8x32xf32>
    %221 = arith.mulf %216, %218 : vector<8x32xf32>
    %222 = arith.addf %220, %221 : vector<8x32xf32>
    %223 = math.tanh %222 : vector<8x32xf32>
    %224 = arith.mulf %219, %223 : vector<8x32xf32>
    %c8_54 = arith.constant 8 : index
    %c0_55 = arith.constant 0 : index
    %225 = vector.load %arg11[%c8_54, %c0_55] : memref<64x128xf32, #tpu.memory_space<vmem>>, vector<8x128xf32>
    %226 = arith.truncf %224 : vector<8x32xf32> to vector<8x32xbf16>
    %cst_56 = arith.constant dense<0.000000e+00> : vector<8x128xf32>
    %227 = tpu.matmul %226, %203, %cst_56 {dimension_numbers = #tpu.dot_dimension_numbers<[1], [0], [0], [1], [0, 0, 1, 1], [], []>} : vector<8x32xbf16>, vector<32x128xbf16>, vector<8x128xf32> -> vector<8x128xf32>
    %228 = arith.addf %225, %227 : vector<8x128xf32>
    %229 = arith.negf %228 : vector<8x128xf32>
    %230 = math.exp %229 : vector<8x128xf32>
    %cst_57 = arith.constant 1.000000e+00 : f32
    %231 = vector.broadcast %cst_57 : f32 to vector<8x128xf32>
    %232 = arith.addf %231, %230 : vector<8x128xf32>
    %233 = arith.divf %231, %232 : vector<8x128xf32>
    %234 = math.tanh %228 : vector<8x128xf32>
    %235 = vector.extract_strided_slice %233 {offsets = [0, 0], sizes = [8, 32], strides = [1, 1]} : vector<8x128xf32> to vector<8x32xf32>
    %236 = vector.extract_strided_slice %233 {offsets = [0, 32], sizes = [8, 32], strides = [1, 1]} : vector<8x128xf32> to vector<8x32xf32>
    %237 = vector.extract_strided_slice %234 {offsets = [0, 64], sizes = [8, 32], strides = [1, 1]} : vector<8x128xf32> to vector<8x32xf32>
    %238 = vector.extract_strided_slice %233 {offsets = [0, 96], sizes = [8, 32], strides = [1, 1]} : vector<8x128xf32> to vector<8x32xf32>
    %239 = arith.mulf %236, %222 : vector<8x32xf32>
    %240 = arith.mulf %235, %237 : vector<8x32xf32>
    %241 = arith.addf %239, %240 : vector<8x32xf32>
    %242 = math.tanh %241 : vector<8x32xf32>
    %243 = arith.mulf %238, %242 : vector<8x32xf32>
    %c16_58 = arith.constant 16 : index
    %c0_59 = arith.constant 0 : index
    %244 = vector.load %arg11[%c16_58, %c0_59] : memref<64x128xf32, #tpu.memory_space<vmem>>, vector<8x128xf32>
    %245 = arith.truncf %243 : vector<8x32xf32> to vector<8x32xbf16>
    %cst_60 = arith.constant dense<0.000000e+00> : vector<8x128xf32>
    %246 = tpu.matmul %245, %203, %cst_60 {dimension_numbers = #tpu.dot_dimension_numbers<[1], [0], [0], [1], [0, 0, 1, 1], [], []>} : vector<8x32xbf16>, vector<32x128xbf16>, vector<8x128xf32> -> vector<8x128xf32>
    %247 = arith.addf %244, %246 : vector<8x128xf32>
    %248 = arith.negf %247 : vector<8x128xf32>
    %249 = math.exp %248 : vector<8x128xf32>
    %cst_61 = arith.constant 1.000000e+00 : f32
    %250 = vector.broadcast %cst_61 : f32 to vector<8x128xf32>
    %251 = arith.addf %250, %249 : vector<8x128xf32>
    %252 = arith.divf %250, %251 : vector<8x128xf32>
    %253 = math.tanh %247 : vector<8x128xf32>
    %254 = vector.extract_strided_slice %252 {offsets = [0, 0], sizes = [8, 32], strides = [1, 1]} : vector<8x128xf32> to vector<8x32xf32>
    %255 = vector.extract_strided_slice %252 {offsets = [0, 32], sizes = [8, 32], strides = [1, 1]} : vector<8x128xf32> to vector<8x32xf32>
    %256 = vector.extract_strided_slice %253 {offsets = [0, 64], sizes = [8, 32], strides = [1, 1]} : vector<8x128xf32> to vector<8x32xf32>
    %257 = vector.extract_strided_slice %252 {offsets = [0, 96], sizes = [8, 32], strides = [1, 1]} : vector<8x128xf32> to vector<8x32xf32>
    %258 = arith.mulf %255, %241 : vector<8x32xf32>
    %259 = arith.mulf %254, %256 : vector<8x32xf32>
    %260 = arith.addf %258, %259 : vector<8x32xf32>
    %261 = math.tanh %260 : vector<8x32xf32>
    %262 = arith.mulf %257, %261 : vector<8x32xf32>
    %c24_62 = arith.constant 24 : index
    %c0_63 = arith.constant 0 : index
    %263 = vector.load %arg11[%c24_62, %c0_63] : memref<64x128xf32, #tpu.memory_space<vmem>>, vector<8x128xf32>
    %264 = arith.truncf %262 : vector<8x32xf32> to vector<8x32xbf16>
    %cst_64 = arith.constant dense<0.000000e+00> : vector<8x128xf32>
    %265 = tpu.matmul %264, %203, %cst_64 {dimension_numbers = #tpu.dot_dimension_numbers<[1], [0], [0], [1], [0, 0, 1, 1], [], []>} : vector<8x32xbf16>, vector<32x128xbf16>, vector<8x128xf32> -> vector<8x128xf32>
    %266 = arith.addf %263, %265 : vector<8x128xf32>
    %267 = arith.negf %266 : vector<8x128xf32>
    %268 = math.exp %267 : vector<8x128xf32>
    %cst_65 = arith.constant 1.000000e+00 : f32
    %269 = vector.broadcast %cst_65 : f32 to vector<8x128xf32>
    %270 = arith.addf %269, %268 : vector<8x128xf32>
    %271 = arith.divf %269, %270 : vector<8x128xf32>
    %272 = math.tanh %266 : vector<8x128xf32>
    %273 = vector.extract_strided_slice %271 {offsets = [0, 0], sizes = [8, 32], strides = [1, 1]} : vector<8x128xf32> to vector<8x32xf32>
    %274 = vector.extract_strided_slice %271 {offsets = [0, 32], sizes = [8, 32], strides = [1, 1]} : vector<8x128xf32> to vector<8x32xf32>
    %275 = vector.extract_strided_slice %272 {offsets = [0, 64], sizes = [8, 32], strides = [1, 1]} : vector<8x128xf32> to vector<8x32xf32>
    %276 = vector.extract_strided_slice %271 {offsets = [0, 96], sizes = [8, 32], strides = [1, 1]} : vector<8x128xf32> to vector<8x32xf32>
    %277 = arith.mulf %274, %260 : vector<8x32xf32>
    %278 = arith.mulf %273, %275 : vector<8x32xf32>
    %279 = arith.addf %277, %278 : vector<8x32xf32>
    %280 = math.tanh %279 : vector<8x32xf32>
    %281 = arith.mulf %276, %280 : vector<8x32xf32>
    %c32_66 = arith.constant 32 : index
    %c0_67 = arith.constant 0 : index
    %282 = vector.load %arg11[%c32_66, %c0_67] : memref<64x128xf32, #tpu.memory_space<vmem>>, vector<8x128xf32>
    %283 = arith.truncf %281 : vector<8x32xf32> to vector<8x32xbf16>
    %cst_68 = arith.constant dense<0.000000e+00> : vector<8x128xf32>
    %284 = tpu.matmul %283, %203, %cst_68 {dimension_numbers = #tpu.dot_dimension_numbers<[1], [0], [0], [1], [0, 0, 1, 1], [], []>} : vector<8x32xbf16>, vector<32x128xbf16>, vector<8x128xf32> -> vector<8x128xf32>
    %285 = arith.addf %282, %284 : vector<8x128xf32>
    %286 = arith.negf %285 : vector<8x128xf32>
    %287 = math.exp %286 : vector<8x128xf32>
    %cst_69 = arith.constant 1.000000e+00 : f32
    %288 = vector.broadcast %cst_69 : f32 to vector<8x128xf32>
    %289 = arith.addf %288, %287 : vector<8x128xf32>
    %290 = arith.divf %288, %289 : vector<8x128xf32>
    %291 = math.tanh %285 : vector<8x128xf32>
    %292 = vector.extract_strided_slice %290 {offsets = [0, 0], sizes = [8, 32], strides = [1, 1]} : vector<8x128xf32> to vector<8x32xf32>
    %293 = vector.extract_strided_slice %290 {offsets = [0, 32], sizes = [8, 32], strides = [1, 1]} : vector<8x128xf32> to vector<8x32xf32>
    %294 = vector.extract_strided_slice %291 {offsets = [0, 64], sizes = [8, 32], strides = [1, 1]} : vector<8x128xf32> to vector<8x32xf32>
    %295 = vector.extract_strided_slice %290 {offsets = [0, 96], sizes = [8, 32], strides = [1, 1]} : vector<8x128xf32> to vector<8x32xf32>
    %296 = arith.mulf %293, %279 : vector<8x32xf32>
    %297 = arith.mulf %292, %294 : vector<8x32xf32>
    %298 = arith.addf %296, %297 : vector<8x32xf32>
    %299 = math.tanh %298 : vector<8x32xf32>
    %300 = arith.mulf %295, %299 : vector<8x32xf32>
    %c40_70 = arith.constant 40 : index
    %c0_71 = arith.constant 0 : index
    %301 = vector.load %arg11[%c40_70, %c0_71] : memref<64x128xf32, #tpu.memory_space<vmem>>, vector<8x128xf32>
    %302 = arith.truncf %300 : vector<8x32xf32> to vector<8x32xbf16>
    %cst_72 = arith.constant dense<0.000000e+00> : vector<8x128xf32>
    %303 = tpu.matmul %302, %203, %cst_72 {dimension_numbers = #tpu.dot_dimension_numbers<[1], [0], [0], [1], [0, 0, 1, 1], [], []>} : vector<8x32xbf16>, vector<32x128xbf16>, vector<8x128xf32> -> vector<8x128xf32>
    %304 = arith.addf %301, %303 : vector<8x128xf32>
    %305 = arith.negf %304 : vector<8x128xf32>
    %306 = math.exp %305 : vector<8x128xf32>
    %cst_73 = arith.constant 1.000000e+00 : f32
    %307 = vector.broadcast %cst_73 : f32 to vector<8x128xf32>
    %308 = arith.addf %307, %306 : vector<8x128xf32>
    %309 = arith.divf %307, %308 : vector<8x128xf32>
    %310 = math.tanh %304 : vector<8x128xf32>
    %311 = vector.extract_strided_slice %309 {offsets = [0, 0], sizes = [8, 32], strides = [1, 1]} : vector<8x128xf32> to vector<8x32xf32>
    %312 = vector.extract_strided_slice %309 {offsets = [0, 32], sizes = [8, 32], strides = [1, 1]} : vector<8x128xf32> to vector<8x32xf32>
    %313 = vector.extract_strided_slice %310 {offsets = [0, 64], sizes = [8, 32], strides = [1, 1]} : vector<8x128xf32> to vector<8x32xf32>
    %314 = vector.extract_strided_slice %309 {offsets = [0, 96], sizes = [8, 32], strides = [1, 1]} : vector<8x128xf32> to vector<8x32xf32>
    %315 = arith.mulf %312, %298 : vector<8x32xf32>
    %316 = arith.mulf %311, %313 : vector<8x32xf32>
    %317 = arith.addf %315, %316 : vector<8x32xf32>
    %318 = math.tanh %317 : vector<8x32xf32>
    %319 = arith.mulf %314, %318 : vector<8x32xf32>
    %c48_74 = arith.constant 48 : index
    %c0_75 = arith.constant 0 : index
    %320 = vector.load %arg11[%c48_74, %c0_75] : memref<64x128xf32, #tpu.memory_space<vmem>>, vector<8x128xf32>
    %321 = arith.truncf %319 : vector<8x32xf32> to vector<8x32xbf16>
    %cst_76 = arith.constant dense<0.000000e+00> : vector<8x128xf32>
    %322 = tpu.matmul %321, %203, %cst_76 {dimension_numbers = #tpu.dot_dimension_numbers<[1], [0], [0], [1], [0, 0, 1, 1], [], []>} : vector<8x32xbf16>, vector<32x128xbf16>, vector<8x128xf32> -> vector<8x128xf32>
    %323 = arith.addf %320, %322 : vector<8x128xf32>
    %324 = arith.negf %323 : vector<8x128xf32>
    %325 = math.exp %324 : vector<8x128xf32>
    %cst_77 = arith.constant 1.000000e+00 : f32
    %326 = vector.broadcast %cst_77 : f32 to vector<8x128xf32>
    %327 = arith.addf %326, %325 : vector<8x128xf32>
    %328 = arith.divf %326, %327 : vector<8x128xf32>
    %329 = math.tanh %323 : vector<8x128xf32>
    %330 = vector.extract_strided_slice %328 {offsets = [0, 0], sizes = [8, 32], strides = [1, 1]} : vector<8x128xf32> to vector<8x32xf32>
    %331 = vector.extract_strided_slice %328 {offsets = [0, 32], sizes = [8, 32], strides = [1, 1]} : vector<8x128xf32> to vector<8x32xf32>
    %332 = vector.extract_strided_slice %329 {offsets = [0, 64], sizes = [8, 32], strides = [1, 1]} : vector<8x128xf32> to vector<8x32xf32>
    %333 = vector.extract_strided_slice %328 {offsets = [0, 96], sizes = [8, 32], strides = [1, 1]} : vector<8x128xf32> to vector<8x32xf32>
    %334 = arith.mulf %331, %317 : vector<8x32xf32>
    %335 = arith.mulf %330, %332 : vector<8x32xf32>
    %336 = arith.addf %334, %335 : vector<8x32xf32>
    %337 = math.tanh %336 : vector<8x32xf32>
    %338 = arith.mulf %333, %337 : vector<8x32xf32>
    %c56_78 = arith.constant 56 : index
    %c0_79 = arith.constant 0 : index
    %339 = vector.load %arg11[%c56_78, %c0_79] : memref<64x128xf32, #tpu.memory_space<vmem>>, vector<8x128xf32>
    %340 = arith.truncf %338 : vector<8x32xf32> to vector<8x32xbf16>
    %cst_80 = arith.constant dense<0.000000e+00> : vector<8x128xf32>
    %341 = tpu.matmul %340, %203, %cst_80 {dimension_numbers = #tpu.dot_dimension_numbers<[1], [0], [0], [1], [0, 0, 1, 1], [], []>} : vector<8x32xbf16>, vector<32x128xbf16>, vector<8x128xf32> -> vector<8x128xf32>
    %342 = arith.addf %339, %341 : vector<8x128xf32>
    %343 = arith.negf %342 : vector<8x128xf32>
    %344 = math.exp %343 : vector<8x128xf32>
    %cst_81 = arith.constant 1.000000e+00 : f32
    %345 = vector.broadcast %cst_81 : f32 to vector<8x128xf32>
    %346 = arith.addf %345, %344 : vector<8x128xf32>
    %347 = arith.divf %345, %346 : vector<8x128xf32>
    %348 = math.tanh %342 : vector<8x128xf32>
    %349 = vector.extract_strided_slice %347 {offsets = [0, 0], sizes = [8, 32], strides = [1, 1]} : vector<8x128xf32> to vector<8x32xf32>
    %350 = vector.extract_strided_slice %347 {offsets = [0, 32], sizes = [8, 32], strides = [1, 1]} : vector<8x128xf32> to vector<8x32xf32>
    %351 = vector.extract_strided_slice %348 {offsets = [0, 64], sizes = [8, 32], strides = [1, 1]} : vector<8x128xf32> to vector<8x32xf32>
    %352 = vector.extract_strided_slice %347 {offsets = [0, 96], sizes = [8, 32], strides = [1, 1]} : vector<8x128xf32> to vector<8x32xf32>
    %353 = arith.mulf %350, %336 : vector<8x32xf32>
    %354 = arith.mulf %349, %351 : vector<8x32xf32>
    %355 = arith.addf %353, %354 : vector<8x32xf32>
    %356 = math.tanh %355 : vector<8x32xf32>
    %357 = arith.mulf %352, %356 : vector<8x32xf32>
    %c0_82 = arith.constant 0 : index
    %c0_83 = arith.constant 0 : index
    %358 = vector.load %arg7[%c0_82, %c0_83] : memref<8x1xf32, #tpu.memory_space<vmem>>, vector<8x1xf32>
    %359 = vector.broadcast %358 : vector<8x1xf32> to vector<8x32xf32>
    %360 = arith.mulf %357, %359 : vector<8x32xf32>
    %361 = arith.truncf %360 : vector<8x32xf32> to vector<8x32xbf16>
    %c0_84 = arith.constant 0 : index
    %c0_85 = arith.constant 0 : index
    %362 = vector.load %arg8[%c0_84, %c0_85] : memref<32x128xbf16, #tpu.memory_space<vmem>>, vector<32x128xbf16>
    %cst_86 = arith.constant dense<0.000000e+00> : vector<8x128xf32>
    %363 = tpu.matmul %361, %362, %cst_86 {dimension_numbers = #tpu.dot_dimension_numbers<[1], [0], [0], [1], [0, 0, 1, 1], [], []>} : vector<8x32xbf16>, vector<32x128xbf16>, vector<8x128xf32> -> vector<8x128xf32>
    %c0_87 = arith.constant 0 : index
    %c0_88 = arith.constant 0 : index
    %364 = vector.load %arg9[%c0_87, %c0_88] : memref<1x128xf32, #tpu.memory_space<vmem>>, vector<1x128xf32>
    %365 = vector.broadcast %364 : vector<1x128xf32> to vector<8x128xf32>
    %366 = arith.addf %363, %365 : vector<8x128xf32>
    %c0_89 = arith.constant 0 : index
    %c0_90 = arith.constant 0 : index
    %367 = vector.load %arg10[%c0_89, %c0_90] : memref<8x128xf32, #tpu.memory_space<vmem>>, vector<8x128xf32>
    tpu.vector_store %arg10[%c0_89, %c0_90], %366 {strides = array<i32>} : memref<8x128xf32, #tpu.memory_space<vmem>>, vector<8x128xf32>,
    return
  }
}

</mosaic_0001>

<llo_original>
// kernel: lstm_forward.1
$region0: #{lstm_forward.1}
  #allocation0 [shape = 'u32[]', space=smem, size = 0x4, offset = 0x4, fixed_abs, tag = 'smem constant byte address 0x4 - core index']
  #allocation1 [shape = 'u32[144,128]{1,0:T(1,128)}', space=vmem, size = 0x12000, scoped, tag = 'internal scratch']
  #allocation2 [shape = 'f32[64,128]{1,0:T(8,128)}', space=vmem, size = 0x8000, scoped, tag = 'scratch operand']
  %s0 = inlined_call_operand.vmem [shape: bf16[64,16], index: 0, kind: input, shape index: {}]
  %s1 = inlined_call_operand.vmem [shape: bf16[16,128], index: 1, kind: input, shape index: {}]
  %s2 = inlined_call_operand.vmem [shape: bf16[32,128], index: 2, kind: input, shape index: {}]
  %s3 = inlined_call_operand.vmem [shape: f32[1,128], index: 3, kind: input, shape index: {}]
  %s4 = inlined_call_operand.vmem [shape: bf16[32,128], index: 4, kind: input, shape index: {}]
  %s5 = inlined_call_operand.vmem [shape: bf16[32,128], index: 5, kind: input, shape index: {}]
  %s6 = inlined_call_operand.vmem [shape: f32[1,128], index: 6, kind: input, shape index: {}]
  %s7 = inlined_call_operand.vmem [shape: f32[8,1], index: 7, kind: input, shape index: {}]
  %s8 = inlined_call_operand.vmem [shape: bf16[32,128], index: 8, kind: input, shape index: {}]
  %s9 = inlined_call_operand.vmem [shape: f32[1,128], index: 9, kind: input, shape index: {}]
  %s10 = inlined_call_operand.hbm [shape: f32[8,128], index: 10, kind: output, shape index: {}]
  %s11 = sld [smem:[#allocation0]]
  $region50: #{lstm_forward.1} parent=0
    _
  %s13 = ssub.s32 1, %s11
  %s14 = scalar_select 0, %s13, %s11
  $region1: #{lstm_forward.1} parent=0
    #allocation3 [shape = 'u8[4096]{0}', space=vmem, size = 0x1000, scoped, tag = 'output window, operand 0, single buffered']
    #allocation4 [shape = 's32[1]{0}', space=sflag, size = 0x4, scoped, tag = 'scoped memory for lstm_forward.1']
    %15 = vsyncpa [#allocation4], 0
    // Predicated region
    $region2: #{lstm_forward.1} parent=1 // pred_check
      _
    $region3: #{lstm_forward.1} parent=1 // pred_check_branch
      %17 = sbr.rel (0) target = $region5
    $region4: #{lstm_forward.1} parent=1 // pred_region
      _
    $region5: #{lstm_forward.1} parent=1 // pred_fallthru
      _
    // Predicated region
    $region6: #{lstm_forward.1} parent=1 // pred_check
      _
    $region7: #{lstm_forward.1} parent=1 // pred_check_branch
      %19 = sbr.rel (0) target = $region9
    $region8: #{lstm_forward.1} parent=1 // pred_region
      _
    $region9: #{lstm_forward.1} parent=1 // pred_fallthru
      _
    // Predicated region
    $region10: #{lstm_forward.1} parent=1 // pred_check
      _
    $region11: #{lstm_forward.1} parent=1 // pred_check_branch
      %21 = sbr.rel (0) target = $region13
    $region12: #{lstm_forward.1} parent=1 // pred_region
      _
    $region13: #{lstm_forward.1} parent=1 // pred_fallthru
      _
    // Predicated region
    $region14: #{lstm_forward.1} parent=1 // pred_check
      _
    $region15: #{lstm_forward.1} parent=1 // pred_check_branch
      %23 = sbr.rel (0) target = $region17
    $region16: #{lstm_forward.1} parent=1 // pred_region
      _
    $region17: #{lstm_forward.1} parent=1 // pred_fallthru
      _
    // Predicated region
    $region18: #{lstm_forward.1} parent=1 // pred_check
      _
    $region19: #{lstm_forward.1} parent=1 // pred_check_branch
      %25 = sbr.rel (0) target = $region21
    $region20: #{lstm_forward.1} parent=1 // pred_region
      _
    $region21: #{lstm_forward.1} parent=1 // pred_fallthru
      _
    // Predicated region
    $region22: #{lstm_forward.1} parent=1 // pred_check
      _
    $region23: #{lstm_forward.1} parent=1 // pred_check_branch
      %27 = sbr.rel (0) target = $region25
    $region24: #{lstm_forward.1} parent=1 // pred_region
      _
    $region25: #{lstm_forward.1} parent=1 // pred_fallthru
      _
    // Predicated region
    $region26: #{lstm_forward.1} parent=1 // pred_check
      _
    $region27: #{lstm_forward.1} parent=1 // pred_check_branch
      %29 = sbr.rel (0) target = $region29
    $region28: #{lstm_forward.1} parent=1 // pred_region
      _
    $region29: #{lstm_forward.1} parent=1 // pred_fallthru
      _
    // Predicated region
    $region30: #{lstm_forward.1} parent=1 // pred_check
      _
    $region31: #{lstm_forward.1} parent=1 // pred_check_branch
      %31 = sbr.rel (0) target = $region33
    $region32: #{lstm_forward.1} parent=1 // pred_region
      _
    $region33: #{lstm_forward.1} parent=1 // pred_fallthru
      _
    // Predicated region
    $region34: #{lstm_forward.1} parent=1 // pred_check
      _
    $region35: #{lstm_forward.1} parent=1 // pred_check_branch
      %33 = sbr.rel (0) target = $region37
    $region36: #{lstm_forward.1} parent=1 // pred_region
      _
    $region37: #{lstm_forward.1} parent=1 // pred_fallthru
      _
    // Predicated region
    $region38: #{lstm_forward.1} parent=1 // pred_check
      _
    $region39: #{lstm_forward.1} parent=1 // pred_check_branch
      %35 = sbr.rel (0) target = $region41
    $region40: #{lstm_forward.1} parent=1 // pred_region
      _
    $region41: #{lstm_forward.1} parent=1 // pred_fallthru
      _
    %v37 = vld [vmem:[%s0] sm:$0xf]
    %v38 = vld [vmem:[%s0 + $0x4] sm:$0xf]
    %v39 = vld [vmem:[%s0 + $0x8] sm:$0xf]
    %v40 = vld [vmem:[%s0 + $0xc] sm:$0xf]
    %v41 = vld [vmem:[%s0 + $0x10] sm:$0xf]
    %v42 = vld [vmem:[%s0 + $0x14] sm:$0xf]
    %v43 = vld [vmem:[%s0 + $0x18] sm:$0xf]
    %v44 = vld [vmem:[%s0 + $0x1c] sm:$0xf]
    %v45 = vld [vmem:[%s1] sm:$0xf]
    %v46 = vld [vmem:[%s1 + $0x4] sm:$0xf]
    %v47 = vld [vmem:[%s3] sm:$0x1]
    %v49 = vlaneseq
    %v50 = vshrl.u32 %v49, 7
    %v51 = vsub.s32 0, %v50
    %v52 = vrot.slane %v47, %v51
    %v62 = vunpack.c.l.b16 %v37
    %v63 = vunpack.c.l.b16 %v38
    %v64 = vunpack.c.l.b16 %v39
    %v65 = vunpack.c.l.b16 %v40
    %v66 = vunpack.c.l.b16 %v41
    %v67 = vunpack.c.l.b16 %v42
    %v68 = vunpack.c.l.b16 %v43
    %v69 = vunpack.c.l.b16 %v44
    %v70 = vpack.c.b16 %v63, %v62
    %v71 = vpack.c.b16 %v65, %v64
    %v72 = vpack.c.b16 %v67, %v66
    %v73 = vpack.c.b16 %v69, %v68
    %v76 = vunpack.c.l.b16 %v45
    %v77 = vunpack.c.l.b16 %v46
    %v78 = vpack.c.b16 %v77, %v76
    %vm80 = vcmask 130048
    %v82 = vsel %vm80, %v70, 0
    %v85 = vsel %vm80, %v71, 0
    %v88 = vsel %vm80, %v72, 0
    %v91 = vsel %vm80, %v73, 0
    %93 = vmatprep.subr.bf16.mxu0 0
    %94 = vmatpush1.bf16.msra.mxu0 %v78
    %95 = vmatprep.subr.bf16.mxu0 0
    %96 = vmatpush1.bf16.msra.mxu0 0
    %97 = vmatprep.subr.bf16.mxu0 0
    %98 = vmatpush1.bf16.msra.mxu0 0
    %99 = vmatprep.subr.bf16.mxu0 0
    %100 = vmatpush1.bf16.msra.mxu0 0
    %101 = vmatprep.subr.bf16.mxu0 0
    %102 = vmatpush1.bf16.msra.mxu0 0
    %103 = vmatprep.subr.bf16.mxu0 0
    %104 = vmatpush1.bf16.msra.mxu0 0
    %105 = vmatprep.subr.bf16.mxu0 0
    %106 = vmatpush1.bf16.msra.mxu0 0
    %107 = vmatprep.subr.bf16.mxu0 0
    %108 = vmatpush1.bf16.msra.mxu0 0
    %109 = vmatprep.subr.bf16.mxu0 0
    %110 = vmatpush1.bf16.msra.mxu0 0
    %111 = vmatprep.subr.bf16.mxu0 0
    %112 = vmatpush1.bf16.msra.mxu0 0
    %113 = vmatprep.subr.bf16.mxu0 0
    %114 = vmatpush1.bf16.msra.mxu0 0
    %115 = vmatprep.subr.bf16.mxu0 0
    %116 = vmatpush1.bf16.msra.mxu0 0
    %117 = vmatprep.subr.bf16.mxu0 0
    %118 = vmatpush1.bf16.msra.mxu0 0
    %119 = vmatprep.subr.bf16.mxu0 0
    %120 = vmatpush1.bf16.msra.mxu0 0
    %121 = vmatprep.subr.bf16.mxu0 0
    %122 = vmatpush1.bf16.msra.mxu0 0
    %123 = vmatprep.subr.bf16.mxu0 0
    %124 = vmatpush1.bf16.msra.mxu0 0
    %125 = vmatprep.mubr.bf16.mxu0 0
    %126 = vmatmul.mubr.bf16.gmra.mrb[0].mxu0 %v82
    %v127 = vpop.f32.mrb[0].mxu0
    %v128 = vadd.f32 %v52, %v127
    %v129 = vpop.f32.mrb[0].mxu0
    %v130 = vpop.f32.mrb[0].mxu0
    %v131 = vadd.f32 %v52, %v130
    %v132 = vpop.f32.mrb[0].mxu0
    %133 = vmatprep.mubr.bf16.mxu0 0
    %134 = vmatmul.mubr.bf16.gmra.mrb[0].mxu0 %v85
    %v135 = vpop.f32.mrb[0].mxu0
    %v136 = vadd.f32 %v52, %v135
    %v137 = vpop.f32.mrb[0].mxu0
    %v138 = vpop.f32.mrb[0].mxu0
    %v139 = vadd.f32 %v52, %v138
    %v140 = vpop.f32.mrb[0].mxu0
    %141 = vmatprep.mubr.bf16.mxu0 0
    %142 = vmatmul.mubr.bf16.gmra.mrb[0].mxu0 %v88
    %v143 = vpop.f32.mrb[0].mxu0
    %v144 = vadd.f32 %v52, %v143
    %v145 = vpop.f32.mrb[0].mxu0
    %v146 = vpop.f32.mrb[0].mxu0
    %v147 = vadd.f32 %v52, %v146
    %v148 = vpop.f32.mrb[0].mxu0
    %149 = vmatprep.mubr.bf16.mxu0 0
    %150 = vmatmul.mubr.bf16.gmra.mrb[0].mxu0 %v91
    %v151 = vpop.f32.mrb[0].mxu0
    %v152 = vadd.f32 %v52, %v151
    %v153 = vpop.f32.mrb[0].mxu0
    %v154 = vpop.f32.mrb[0].mxu0
    %v155 = vadd.f32 %v52, %v154
    %v156 = vpop.f32.mrb[0].mxu0
    %157 = vdwg.mxu0
    %v158 = vld [vmem:[%s2] sm:$0xf]
    %v159 = vld [vmem:[%s2 + $0x4] sm:$0xf]
    %v160 = vld [vmem:[%s2 + $0x8] sm:$0xf]
    %v161 = vld [vmem:[%s2 + $0xc] sm:$0xf]
    %v162 = vld [vmem:[%s4] sm:$0xf]
    %v163 = vld [vmem:[%s4 + $0x4] sm:$0xf]
    %v164 = vld [vmem:[%s4 + $0x8] sm:$0xf]
    %v165 = vld [vmem:[%s4 + $0xc] sm:$0xf]
    %v166 = vld [vmem:[%s6] sm:$0x1]
    %v171 = vunpack.c.l.b16 %v158
    %v172 = vunpack.c.l.b16 %v159
    %v173 = vunpack.c.l.b16 %v160
    %v174 = vunpack.c.l.b16 %v161
    %v175 = vpack.c.b16 %v172, %v171
    %v176 = vpack.c.b16 %v174, %v173
    %vm179 = vcmask 261120
    %v181 = vsel %vm179, 0, 0
    %183 = vmatprep.subr.bf16.mxu0 0
    %184 = vmatpush1.bf16.msra.mxu0 %v175
    %185 = vmatprep.subr.bf16.mxu0 0
    %186 = vmatpush1.bf16.msra.mxu0 %v176
    %187 = vmatprep.subr.bf16.mxu0 0
    %188 = vmatpush1.bf16.msra.mxu0 0
    %189 = vmatprep.subr.bf16.mxu0 0
    %190 = vmatpush1.bf16.msra.mxu0 0
    %191 = vmatprep.subr.bf16.mxu0 0
    %192 = vmatpush1.bf16.msra.mxu0 0
    %193 = vmatprep.subr.bf16.mxu0 0
    %194 = vmatpush1.bf16.msra.mxu0 0
    %195 = vmatprep.subr.bf16.mxu0 0
    %196 = vmatpush1.bf16.msra.mxu0 0
    %197 = vmatprep.subr.bf16.mxu0 0
    %198 = vmatpush1.bf16.msra.mxu0 0
    %199 = vmatprep.subr.bf16.mxu0 0
    %200 = vmatpush1.bf16.msra.mxu0 0
    %201 = vmatprep.subr.bf16.mxu0 0
    %202 = vmatpush1.bf16.msra.mxu0 0
    %203 = vmatprep.subr.bf16.mxu0 0
    %204 = vmatpush1.bf16.msra.mxu0 0
    %205 = vmatprep.subr.bf16.mxu0 0
    %206 = vmatpush1.bf16.msra.mxu0 0
    %207 = vmatprep.subr.bf16.mxu0 0
    %208 = vmatpush1.bf16.msra.mxu0 0
    %209 = vmatprep.subr.bf16.mxu0 0
    %210 = vmatpush1.bf16.msra.mxu0 0
    %211 = vmatprep.subr.bf16.mxu0 0
    %212 = vmatpush1.bf16.msra.mxu0 0
    %213 = vmatprep.subr.bf16.mxu0 0
    %214 = vmatpush1.bf16.msra.mxu0 0
    %215 = vmatprep.mubr.bf16.mxu0 0
    %216 = vmatmul.mubr.bf16.gmra.mrb[0].mxu0 %v181
    %v217 = vpop.f32.mrb[0].mxu0
    %v218 = vadd.f32 0.0, %v217
    %v219 = vpop.f32.mrb[0].mxu0
    %v220 = vpop.f32.mrb[0].mxu0
    %v221 = vpop.f32.mrb[0].mxu0
    %222 = vdwg.mxu0
    %v223 = vadd.f32 %v128, %v218
    %v224 = vxor.u32 %v223, 2147483648
    %v225 = vmul.f32 %v224, 1.442695
    %v226 = vpow.pop %v225
    %v227 = vadd.f32 %v226, 1.0
    %v228 = vrcp.pop %v227
    %v229 = vmul.f32 1.0, %v228
    %v230 = vtanh.pop %v223
    %v231 = vmul.f32 %v229, 0.0
    %233 = vrot.lane.b32.xlu0 %v230, 64
    %v234 = vpop.permute.xlu0 %233
    %v236 = vmul.f32 %v229, %v234
    %238 = vrot.lane.b32.xlu0 %v236, 32
    %v239 = vpop.permute.xlu0 %238
    %v241 = vadd.f32 %v231, %v239
    %v242 = vtanh.pop %v241
    %244 = vrot.lane.b32.xlu0 %v242, 64
    %v245 = vpop.permute.xlu0 %244
    %v247 = vmul.f32 %v229, %v245
    %v248 = vpack.c.bf16 %v247, %v247
    %v250 = vlaneseq
    %v251 = vshrl.u32 %v250, 7
    %v252 = vsub.s32 0, %v251
    %v253 = vrot.slane %v166, %v252
    %256 = vrot.lane.b32.xlu0 %v248, 32
    %v257 = vpop.permute.xlu0 %256
    %v262 = vunpack.c.l.b16 %v162
    %v263 = vunpack.c.l.b16 %v163
    %v264 = vunpack.c.l.b16 %v164
    %v265 = vunpack.c.l.b16 %v165
    %v266 = vpack.c.b16 %v263, %v262
    %v267 = vpack.c.b16 %v265, %v264
    %v271 = vsel %vm179, %v257, 0
    %273 = vmatprep.subr.bf16.mxu0 0
    %274 = vmatpush1.bf16.msra.mxu0 %v266
    %275 = vmatprep.subr.bf16.mxu0 0
    %276 = vmatpush1.bf16.msra.mxu0 %v267
    %277 = vmatprep.subr.bf16.mxu0 0
    %278 = vmatpush1.bf16.msra.mxu0 0
    %279 = vmatprep.subr.bf16.mxu0 0
    %280 = vmatpush1.bf16.msra.mxu0 0
    %281 = vmatprep.subr.bf16.mxu0 0
    %282 = vmatpush1.bf16.msra.mxu0 0
    %283 = vmatprep.subr.bf16.mxu0 0
    %284 = vmatpush1.bf16.msra.mxu0 0
    %285 = vmatprep.subr.bf16.mxu0 0
    %286 = vmatpush1.bf16.msra.mxu0 0
    %287 = vmatprep.subr.bf16.mxu0 0
    %288 = vmatpush1.bf16.msra.mxu0 0
    %289 = vmatprep.subr.bf16.mxu0 0
    %290 = vmatpush1.bf16.msra.mxu0 0
    %291 = vmatprep.subr.bf16.mxu0 0
    %292 = vmatpush1.bf16.msra.mxu0 0
    %293 = vmatprep.subr.bf16.mxu0 0
    %294 = vmatpush1.bf16.msra.mxu0 0
    %295 = vmatprep.subr.bf16.mxu0 0
    %296 = vmatpush1.bf16.msra.mxu0 0
    %297 = vmatprep.subr.bf16.mxu0 0
    %298 = vmatpush1.bf16.msra.mxu0 0
    %299 = vmatprep.subr.bf16.mxu0 0
    %300 = vmatpush1.bf16.msra.mxu0 0
    %301 = vmatprep.subr.bf16.mxu0 0
    %302 = vmatpush1.bf16.msra.mxu0 0
    %303 = vmatprep.subr.bf16.mxu0 0
    %304 = vmatpush1.bf16.msra.mxu0 0
    %305 = vmatprep.mubr.bf16.mxu0 0
    %306 = vmatmul.mubr.bf16.gmra.mrb[0].mxu0 %v271
    %v307 = vpop.f32.mrb[0].mxu0
    %v308 = vadd.f32 %v253, %v307
    %v309 = vpop.f32.mrb[0].mxu0
    %v310 = vpop.f32.mrb[0].mxu0
    %v311 = vpop.f32.mrb[0].mxu0
    %312 = vdwg.mxu0
    %313 = vst [vmem:[#allocation2] sm:$0xff] %v308
    %314 = vmatprep.subr.bf16.mxu0 0
    %315 = vmatpush1.bf16.msra.mxu0 %v175
    %316 = vmatprep.subr.bf16.mxu0 0
    %317 = vmatpush1.bf16.msra.mxu0 %v176
    %318 = vmatprep.subr.bf16.mxu0 0
    %319 = vmatpush1.bf16.msra.mxu0 0
    %320 = vmatprep.subr.bf16.mxu0 0
    %321 = vmatpush1.bf16.msra.mxu0 0
    %322 = vmatprep.subr.bf16.mxu0 0
    %323 = vmatpush1.bf16.msra.mxu0 0
    %324 = vmatprep.subr.bf16.mxu0 0
    %325 = vmatpush1.bf16.msra.mxu0 0
    %326 = vmatprep.subr.bf16.mxu0 0
    %327 = vmatpush1.bf16.msra.mxu0 0
    %328 = vmatprep.subr.bf16.mxu0 0
    %329 = vmatpush1.bf16.msra.mxu0 0
    %330 = vmatprep.subr.bf16.mxu0 0
    %331 = vmatpush1.bf16.msra.mxu0 0
    %332 = vmatprep.subr.bf16.mxu0 0
    %333 = vmatpush1.bf16.msra.mxu0 0
    %334 = vmatprep.subr.bf16.mxu0 0
    %335 = vmatpush1.bf16.msra.mxu0 0
    %336 = vmatprep.subr.bf16.mxu0 0
    %337 = vmatpush1.bf16.msra.mxu0 0
    %338 = vmatprep.subr.bf16.mxu0 0
    %339 = vmatpush1.bf16.msra.mxu0 0
    %340 = vmatprep.subr.bf16.mxu0 0
    %341 = vmatpush1.bf16.msra.mxu0 0
    %342 = vmatprep.subr.bf16.mxu0 0
    %343 = vmatpush1.bf16.msra.mxu0 0
    %344 = vmatprep.subr.bf16.mxu0 0
    %345 = vmatpush1.bf16.msra.mxu0 0
    %346 = vmatprep.mubr.bf16.mxu0 0
    %347 = vmatmul.mubr.bf16.gmra.mrb[0].mxu0 %v271
    %v348 = vpop.f32.mrb[0].mxu0
    %v349 = vadd.f32 0.0, %v348
    %v350 = vpop.f32.mrb[0].mxu0
    %v351 = vpop.f32.mrb[0].mxu0
    %v352 = vpop.f32.mrb[0].mxu0
    %353 = vdwg.mxu0
    %v354 = vadd.f32 %v131, %v349
    %v355 = vxor.u32 %v354, 2147483648
    %v356 = vmul.f32 %v355, 1.442695
    %v357 = vpow.pop %v356
    %v358 = vadd.f32 %v357, 1.0
    %v359 = vrcp.pop %v358
    %v360 = vmul.f32 1.0, %v359
    %v361 = vtanh.pop %v354
    %v362 = vmul.f32 %v360, %v241
    %364 = vrot.lane.b32.xlu0 %v361, 64
    %v365 = vpop.permute.xlu0 %364
    %v367 = vmul.f32 %v360, %v365
    %369 = vrot.lane.b32.xlu0 %v367, 32
    %v370 = vpop.permute.xlu0 %369
    %v372 = vadd.f32 %v362, %v370
    %v373 = vtanh.pop %v372
    %375 = vrot.lane.b32.xlu0 %v373, 64
    %v376 = vpop.permute.xlu0 %375
    %v378 = vmul.f32 %v360, %v376
    %v379 = vpack.c.bf16 %v378, %v378
    %381 = vrot.lane.b32.xlu0 %v379, 32
    %v382 = vpop.permute.xlu0 %381
    %v384 = vsel %vm179, %v382, 0
    %386 = vmatprep.subr.bf16.mxu0 0
    %387 = vmatpush1.bf16.msra.mxu0 %v266
    %388 = vmatprep.subr.bf16.mxu0 0
    %389 = vmatpush1.bf16.msra.mxu0 %v267
    %390 = vmatprep.subr.bf16.mxu0 0
    %391 = vmatpush1.bf16.msra.mxu0 0
    %392 = vmatprep.subr.bf16.mxu0 0
    %393 = vmatpush1.bf16.msra.mxu0 0
    %394 = vmatprep.subr.bf16.mxu0 0
    %395 = vmatpush1.bf16.msra.mxu0 0
    %396 = vmatprep.subr.bf16.mxu0 0
    %397 = vmatpush1.bf16.msra.mxu0 0
    %398 = vmatprep.subr.bf16.mxu0 0
    %399 = vmatpush1.bf16.msra.mxu0 0
    %400 = vmatprep.subr.bf16.mxu0 0
    %401 = vmatpush1.bf16.msra.mxu0 0
    %402 = vmatprep.subr.bf16.mxu0 0
    %403 = vmatpush1.bf16.msra.mxu0 0
    %404 = vmatprep.subr.bf16.mxu0 0
    %405 = vmatpush1.bf16.msra.mxu0 0
    %406 = vmatprep.subr.bf16.mxu0 0
    %407 = vmatpush1.bf16.msra.mxu0 0
    %408 = vmatprep.subr.bf16.mxu0 0
    %409 = vmatpush1.bf16.msra.mxu0 0
    %410 = vmatprep.subr.bf16.mxu0 0
    %411 = vmatpush1.bf16.msra.mxu0 0
    %412 = vmatprep.subr.bf16.mxu0 0
    %413 = vmatpush1.bf16.msra.mxu0 0
    %414 = vmatprep.subr.bf16.mxu0 0
    %415 = vmatpush1.bf16.msra.mxu0 0
    %416 = vmatprep.subr.bf16.mxu0 0
    %417 = vmatpush1.bf16.msra.mxu0 0
    %418 = vmatprep.mubr.bf16.mxu0 0
    %419 = vmatmul.mubr.bf16.gmra.mrb[0].mxu0 %v384
    %v420 = vpop.f32.mrb[0].mxu0
    %v421 = vadd.f32 %v253, %v420
    %v422 = vpop.f32.mrb[0].mxu0
    %v423 = vpop.f32.mrb[0].mxu0
    %v424 = vpop.f32.mrb[0].mxu0
    %425 = vdwg.mxu0
    %426 = vst [vmem:[#allocation2 + $0x8] sm:$0xff] %v421
    %427 = vmatprep.subr.bf16.mxu0 0
    %428 = vmatpush1.bf16.msra.mxu0 %v175
    %429 = vmatprep.subr.bf16.mxu0 0
    %430 = vmatpush1.bf16.msra.mxu0 %v176
    %431 = vmatprep.subr.bf16.mxu0 0
    %432 = vmatpush1.bf16.msra.mxu0 0
    %433 = vmatprep.subr.bf16.mxu0 0
    %434 = vmatpush1.bf16.msra.mxu0 0
    %435 = vmatprep.subr.bf16.mxu0 0
    %436 = vmatpush1.bf16.msra.mxu0 0
    %437 = vmatprep.subr.bf16.mxu0 0
    %438 = vmatpush1.bf16.msra.mxu0 0
    %439 = vmatprep.subr.bf16.mxu0 0
    %440 = vmatpush1.bf16.msra.mxu0 0
    %441 = vmatprep.subr.bf16.mxu0 0
    %442 = vmatpush1.bf16.msra.mxu0 0
    %443 = vmatprep.subr.bf16.mxu0 0
    %444 = vmatpush1.bf16.msra.mxu0 0
    %445 = vmatprep.subr.bf16.mxu0 0
    %446 = vmatpush1.bf16.msra.mxu0 0
    %447 = vmatprep.subr.bf16.mxu0 0
    %448 = vmatpush1.bf16.msra.mxu0 0
    %449 = vmatprep.subr.bf16.mxu0 0
    %450 = vmatpush1.bf16.msra.mxu0 0
    %451 = vmatprep.subr.bf16.mxu0 0
    %452 = vmatpush1.bf16.msra.mxu0 0
    %453 = vmatprep.subr.bf16.mxu0 0
    %454 = vmatpush1.bf16.msra.mxu0 0
    %455 = vmatprep.subr.bf16.mxu0 0
    %456 = vmatpush1.bf16.msra.mxu0 0
    %457 = vmatprep.subr.bf16.mxu0 0
    %458 = vmatpush1.bf16.msra.mxu0 0
    %459 = vmatprep.mubr.bf16.mxu0 0
    %460 = vmatmul.mubr.bf16.gmra.mrb[0].mxu0 %v384
    %v461 = vpop.f32.mrb[0].mxu0
    %v462 = vadd.f32 0.0, %v461
    %v463 = vpop.f32.mrb[0].mxu0
    %v464 = vpop.f32.mrb[0].mxu0
    %v465 = vpop.f32.mrb[0].mxu0
    %466 = vdwg.mxu0
    %v467 = vadd.f32 %v136, %v462
    %v468 = vxor.u32 %v467, 2147483648
    %v469 = vmul.f32 %v468, 1.442695
    %v470 = vpow.pop %v469
    %v471 = vadd.f32 %v470, 1.0
    %v472 = vrcp.pop %v471
    %v473 = vmul.f32 1.0, %v472
    %v474 = vtanh.pop %v467
    %v475 = vmul.f32 %v473, %v372
    %477 = vrot.lane.b32.xlu0 %v474, 64
    %v478 = vpop.permute.xlu0 %477
    %v480 = vmul.f32 %v473, %v478
    %482 = vrot.lane.b32.xlu0 %v480, 32
    %v483 = vpop.permute.xlu0 %482
    %v485 = vadd.f32 %v475, %v483
    %v486 = vtanh.pop %v485
    %488 = vrot.lane.b32.xlu0 %v486, 64
    %v489 = vpop.permute.xlu0 %488
    %v491 = vmul.f32 %v473, %v489
    %v492 = vpack.c.bf16 %v491, %v491
    %494 = vrot.lane.b32.xlu0 %v492, 32
    %v495 = vpop.permute.xlu0 %494
    %v497 = vsel %vm179, %v495, 0
    %499 = vmatprep.subr.bf16.mxu0 0
    %500 = vmatpush1.bf16.msra.mxu0 %v266
    %501 = vmatprep.subr.bf16.mxu0 0
    %502 = vmatpush1.bf16.msra.mxu0 %v267
    %503 = vmatprep.subr.bf16.mxu0 0
    %504 = vmatpush1.bf16.msra.mxu0 0
    %505 = vmatprep.subr.bf16.mxu0 0
    %506 = vmatpush1.bf16.msra.mxu0 0
    %507 = vmatprep.subr.bf16.mxu0 0
    %508 = vmatpush1.bf16.msra.mxu0 0
    %509 = vmatprep.subr.bf16.mxu0 0
    %510 = vmatpush1.bf16.msra.mxu0 0
    %511 = vmatprep.subr.bf16.mxu0 0
    %512 = vmatpush1.bf16.msra.mxu0 0
    %513 = vmatprep.subr.bf16.mxu0 0
    %514 = vmatpush1.bf16.msra.mxu0 0
    %515 = vmatprep.subr.bf16.mxu0 0
    %516 = vmatpush1.bf16.msra.mxu0 0
    %517 = vmatprep.subr.bf16.mxu0 0
    %518 = vmatpush1.bf16.msra.mxu0 0
    %519 = vmatprep.subr.bf16.mxu0 0
    %520 = vmatpush1.bf16.msra.mxu0 0
    %521 = vmatprep.subr.bf16.mxu0 0
    %522 = vmatpush1.bf16.msra.mxu0 0
    %523 = vmatprep.subr.bf16.mxu0 0
    %524 = vmatpush1.bf16.msra.mxu0 0
    %525 = vmatprep.subr.bf16.mxu0 0
    %526 = vmatpush1.bf16.msra.mxu0 0
    %527 = vmatprep.subr.bf16.mxu0 0
    %528 = vmatpush1.bf16.msra.mxu0 0
    %529 = vmatprep.subr.bf16.mxu0 0
    %530 = vmatpush1.bf16.msra.mxu0 0
    %531 = vmatprep.mubr.bf16.mxu0 0
    %532 = vmatmul.mubr.bf16.gmra.mrb[0].mxu0 %v497
    %v533 = vpop.f32.mrb[0].mxu0
    %v534 = vadd.f32 %v253, %v533
    %v535 = vpop.f32.mrb[0].mxu0
    %v536 = vpop.f32.mrb[0].mxu0
    %v537 = vpop.f32.mrb[0].mxu0
    %538 = vdwg.mxu0
    %539 = vst [vmem:[#allocation2 + $0x10] sm:$0xff] %v534
    %540 = vmatprep.subr.bf16.mxu0 0
    %541 = vmatpush1.bf16.msra.mxu0 %v175
    %542 = vmatprep.subr.bf16.mxu0 0
    %543 = vmatpush1.bf16.msra.mxu0 %v176
    %544 = vmatprep.subr.bf16.mxu0 0
    %545 = vmatpush1.bf16.msra.mxu0 0
    %546 = vmatprep.subr.bf16.mxu0 0
    %547 = vmatpush1.bf16.msra.mxu0 0
    %548 = vmatprep.subr.bf16.mxu0 0
    %549 = vmatpush1.bf16.msra.mxu0 0
    %550 = vmatprep.subr.bf16.mxu0 0
    %551 = vmatpush1.bf16.msra.mxu0 0
    %552 = vmatprep.subr.bf16.mxu0 0
    %553 = vmatpush1.bf16.msra.mxu0 0
    %554 = vmatprep.subr.bf16.mxu0 0
    %555 = vmatpush1.bf16.msra.mxu0 0
    %556 = vmatprep.subr.bf16.mxu0 0
    %557 = vmatpush1.bf16.msra.mxu0 0
    %558 = vmatprep.subr.bf16.mxu0 0
    %559 = vmatpush1.bf16.msra.mxu0 0
    %560 = vmatprep.subr.bf16.mxu0 0
    %561 = vmatpush1.bf16.msra.mxu0 0
    %562 = vmatprep.subr.bf16.mxu0 0
    %563 = vmatpush1.bf16.msra.mxu0 0
    %564 = vmatprep.subr.bf16.mxu0 0
    %565 = vmatpush1.bf16.msra.mxu0 0
    %566 = vmatprep.subr.bf16.mxu0 0
    %567 = vmatpush1.bf16.msra.mxu0 0
    %568 = vmatprep.subr.bf16.mxu0 0
    %569 = vmatpush1.bf16.msra.mxu0 0
    %570 = vmatprep.subr.bf16.mxu0 0
    %571 = vmatpush1.bf16.msra.mxu0 0
    %572 = vmatprep.mubr.bf16.mxu0 0
    %573 = vmatmul.mubr.bf16.gmra.mrb[0].mxu0 %v497
    %v574 = vpop.f32.mrb[0].mxu0
    %v575 = vadd.f32 0.0, %v574
    %v576 = vpop.f32.mrb[0].mxu0
    %v577 = vpop.f32.mrb[0].mxu0
    %v578 = vpop.f32.mrb[0].mxu0
    %579 = vdwg.mxu0
    %v580 = vadd.f32 %v139, %v575
    %v581 = vxor.u32 %v580, 2147483648
    %v582 = vmul.f32 %v581, 1.442695
    %v583 = vpow.pop %v582
    %v584 = vadd.f32 %v583, 1.0
    %v585 = vrcp.pop %v584
    %v586 = vmul.f32 1.0, %v585
    %v587 = vtanh.pop %v580
    %v588 = vmul.f32 %v586, %v485
    %590 = vrot.lane.b32.xlu0 %v587, 64
    %v591 = vpop.permute.xlu0 %590
    %v593 = vmul.f32 %v586, %v591
    %595 = vrot.lane.b32.xlu0 %v593, 32
    %v596 = vpop.permute.xlu0 %595
    %v598 = vadd.f32 %v588, %v596
    %v599 = vtanh.pop %v598
    %601 = vrot.lane.b32.xlu0 %v599, 64
    %v602 = vpop.permute.xlu0 %601
    %v604 = vmul.f32 %v586, %v602
    %v605 = vpack.c.bf16 %v604, %v604
    %607 = vrot.lane.b32.xlu0 %v605, 32
    %v608 = vpop.permute.xlu0 %607
    %v610 = vsel %vm179, %v608, 0
    %612 = vmatprep.subr.bf16.mxu0 0
    %613 = vmatpush1.bf16.msra.mxu0 %v266
    %614 = vmatprep.subr.bf16.mxu0 0
    %615 = vmatpush1.bf16.msra.mxu0 %v267
    %616 = vmatprep.subr.bf16.mxu0 0
    %617 = vmatpush1.bf16.msra.mxu0 0
    %618 = vmatprep.subr.bf16.mxu0 0
    %619 = vmatpush1.bf16.msra.mxu0 0
    %620 = vmatprep.subr.bf16.mxu0 0
    %621 = vmatpush1.bf16.msra.mxu0 0
    %622 = vmatprep.subr.bf16.mxu0 0
    %623 = vmatpush1.bf16.msra.mxu0 0
    %624 = vmatprep.subr.bf16.mxu0 0
    %625 = vmatpush1.bf16.msra.mxu0 0
    %626 = vmatprep.subr.bf16.mxu0 0
    %627 = vmatpush1.bf16.msra.mxu0 0
    %628 = vmatprep.subr.bf16.mxu0 0
    %629 = vmatpush1.bf16.msra.mxu0 0
    %630 = vmatprep.subr.bf16.mxu0 0
    %631 = vmatpush1.bf16.msra.mxu0 0
    %632 = vmatprep.subr.bf16.mxu0 0
    %633 = vmatpush1.bf16.msra.mxu0 0
    %634 = vmatprep.subr.bf16.mxu0 0
    %635 = vmatpush1.bf16.msra.mxu0 0
    %636 = vmatprep.subr.bf16.mxu0 0
    %637 = vmatpush1.bf16.msra.mxu0 0
    %638 = vmatprep.subr.bf16.mxu0 0
    %639 = vmatpush1.bf16.msra.mxu0 0
    %640 = vmatprep.subr.bf16.mxu0 0
    %641 = vmatpush1.bf16.msra.mxu0 0
    %642 = vmatprep.subr.bf16.mxu0 0
    %643 = vmatpush1.bf16.msra.mxu0 0
    %644 = vmatprep.mubr.bf16.mxu0 0
    %645 = vmatmul.mubr.bf16.gmra.mrb[0].mxu0 %v610
    %v646 = vpop.f32.mrb[0].mxu0
    %v647 = vadd.f32 %v253, %v646
    %v648 = vpop.f32.mrb[0].mxu0
    %v649 = vpop.f32.mrb[0].mxu0
    %v650 = vpop.f32.mrb[0].mxu0
    %651 = vdwg.mxu0
    %652 = vst [vmem:[#allocation2 + $0x18] sm:$0xff] %v647
    %653 = vmatprep.subr.bf16.mxu0 0
    %654 = vmatpush1.bf16.msra.mxu0 %v175
    %655 = vmatprep.subr.bf16.mxu0 0
    %656 = vmatpush1.bf16.msra.mxu0 %v176
    %657 = vmatprep.subr.bf16.mxu0 0
    %658 = vmatpush1.bf16.msra.mxu0 0
    %659 = vmatprep.subr.bf16.mxu0 0
    %660 = vmatpush1.bf16.msra.mxu0 0
    %661 = vmatprep.subr.bf16.mxu0 0
    %662 = vmatpush1.bf16.msra.mxu0 0
    %663 = vmatprep.subr.bf16.mxu0 0
    %664 = vmatpush1.bf16.msra.mxu0 0
    %665 = vmatprep.subr.bf16.mxu0 0
    %666 = vmatpush1.bf16.msra.mxu0 0
    %667 = vmatprep.subr.bf16.mxu0 0
    %668 = vmatpush1.bf16.msra.mxu0 0
    %669 = vmatprep.subr.bf16.mxu0 0
    %670 = vmatpush1.bf16.msra.mxu0 0
    %671 = vmatprep.subr.bf16.mxu0 0
    %672 = vmatpush1.bf16.msra.mxu0 0
    %673 = vmatprep.subr.bf16.mxu0 0
    %674 = vmatpush1.bf16.msra.mxu0 0
    %675 = vmatprep.subr.bf16.mxu0 0
    %676 = vmatpush1.bf16.msra.mxu0 0
    %677 = vmatprep.subr.bf16.mxu0 0
    %678 = vmatpush1.bf16.msra.mxu0 0
    %679 = vmatprep.subr.bf16.mxu0 0
    %680 = vmatpush1.bf16.msra.mxu0 0
    %681 = vmatprep.subr.bf16.mxu0 0
    %682 = vmatpush1.bf16.msra.mxu0 0
    %683 = vmatprep.subr.bf16.mxu0 0
    %684 = vmatpush1.bf16.msra.mxu0 0
    %685 = vmatprep.mubr.bf16.mxu0 0
    %686 = vmatmul.mubr.bf16.gmra.mrb[0].mxu0 %v610
    %v687 = vpop.f32.mrb[0].mxu0
    %v688 = vadd.f32 0.0, %v687
    %v689 = vpop.f32.mrb[0].mxu0
    %v690 = vpop.f32.mrb[0].mxu0
    %v691 = vpop.f32.mrb[0].mxu0
    %692 = vdwg.mxu0
    %v693 = vadd.f32 %v144, %v688
    %v694 = vxor.u32 %v693, 2147483648
    %v695 = vmul.f32 %v694, 1.442695
    %v696 = vpow.pop %v695
    %v697 = vadd.f32 %v696, 1.0
    %v698 = vrcp.pop %v697
    %v699 = vmul.f32 1.0, %v698
    %v700 = vtanh.pop %v693
    %v701 = vmul.f32 %v699, %v598
    %703 = vrot.lane.b32.xlu0 %v700, 64
    %v704 = vpop.permute.xlu0 %703
    %v706 = vmul.f32 %v699, %v704
    %708 = vrot.lane.b32.xlu0 %v706, 32
    %v709 = vpop.permute.xlu0 %708
    %v711 = vadd.f32 %v701, %v709
    %v712 = vtanh.pop %v711
    %714 = vrot.lane.b32.xlu0 %v712, 64
    %v715 = vpop.permute.xlu0 %714
    %v717 = vmul.f32 %v699, %v715
    %v718 = vpack.c.bf16 %v717, %v717
    %720 = vrot.lane.b32.xlu0 %v718, 32
    %v721 = vpop.permute.xlu0 %720
    %v723 = vsel %vm179, %v721, 0
    %725 = vmatprep.subr.bf16.mxu0 0
    %726 = vmatpush1.bf16.msra.mxu0 %v266
    %727 = vmatprep.subr.bf16.mxu0 0
    %728 = vmatpush1.bf16.msra.mxu0 %v267
    %729 = vmatprep.subr.bf16.mxu0 0
    %730 = vmatpush1.bf16.msra.mxu0 0
    %731 = vmatprep.subr.bf16.mxu0 0
    %732 = vmatpush1.bf16.msra.mxu0 0
    %733 = vmatprep.subr.bf16.mxu0 0
    %734 = vmatpush1.bf16.msra.mxu0 0
    %735 = vmatprep.subr.bf16.mxu0 0
    %736 = vmatpush1.bf16.msra.mxu0 0
    %737 = vmatprep.subr.bf16.mxu0 0
    %738 = vmatpush1.bf16.msra.mxu0 0
    %739 = vmatprep.subr.bf16.mxu0 0
    %740 = vmatpush1.bf16.msra.mxu0 0
    %741 = vmatprep.subr.bf16.mxu0 0
    %742 = vmatpush1.bf16.msra.mxu0 0
    %743 = vmatprep.subr.bf16.mxu0 0
    %744 = vmatpush1.bf16.msra.mxu0 0
    %745 = vmatprep.subr.bf16.mxu0 0
    %746 = vmatpush1.bf16.msra.mxu0 0
    %747 = vmatprep.subr.bf16.mxu0 0
    %748 = vmatpush1.bf16.msra.mxu0 0
    %749 = vmatprep.subr.bf16.mxu0 0
    %750 = vmatpush1.bf16.msra.mxu0 0
    %751 = vmatprep.subr.bf16.mxu0 0
    %752 = vmatpush1.bf16.msra.mxu0 0
    %753 = vmatprep.subr.bf16.mxu0 0
    %754 = vmatpush1.bf16.msra.mxu0 0
    %755 = vmatprep.subr.bf16.mxu0 0
    %756 = vmatpush1.bf16.msra.mxu0 0
    %757 = vmatprep.mubr.bf16.mxu0 0
    %758 = vmatmul.mubr.bf16.gmra.mrb[0].mxu0 %v723
    %v759 = vpop.f32.mrb[0].mxu0
    %v760 = vadd.f32 %v253, %v759
    %v761 = vpop.f32.mrb[0].mxu0
    %v762 = vpop.f32.mrb[0].mxu0
    %v763 = vpop.f32.mrb[0].mxu0
    %764 = vdwg.mxu0
    %765 = vst [vmem:[#allocation2 + $0x20] sm:$0xff] %v760
    %766 = vmatprep.subr.bf16.mxu0 0
    %767 = vmatpush1.bf16.msra.mxu0 %v175
    %768 = vmatprep.subr.bf16.mxu0 0
    %769 = vmatpush1.bf16.msra.mxu0 %v176
    %770 = vmatprep.subr.bf16.mxu0 0
    %771 = vmatpush1.bf16.msra.mxu0 0
    %772 = vmatprep.subr.bf16.mxu0 0
    %773 = vmatpush1.bf16.msra.mxu0 0
    %774 = vmatprep.subr.bf16.mxu0 0
    %775 = vmatpush1.bf16.msra.mxu0 0
    %776 = vmatprep.subr.bf16.mxu0 0
    %777 = vmatpush1.bf16.msra.mxu0 0
    %778 = vmatprep.subr.bf16.mxu0 0
    %779 = vmatpush1.bf16.msra.mxu0 0
    %780 = vmatprep.subr.bf16.mxu0 0
    %781 = vmatpush1.bf16.msra.mxu0 0
    %782 = vmatprep.subr.bf16.mxu0 0
    %783 = vmatpush1.bf16.msra.mxu0 0
    %784 = vmatprep.subr.bf16.mxu0 0
    %785 = vmatpush1.bf16.msra.mxu0 0
    %786 = vmatprep.subr.bf16.mxu0 0
    %787 = vmatpush1.bf16.msra.mxu0 0
    %788 = vmatprep.subr.bf16.mxu0 0
    %789 = vmatpush1.bf16.msra.mxu0 0
    %790 = vmatprep.subr.bf16.mxu0 0
    %791 = vmatpush1.bf16.msra.mxu0 0
    %792 = vmatprep.subr.bf16.mxu0 0
    %793 = vmatpush1.bf16.msra.mxu0 0
    %794 = vmatprep.subr.bf16.mxu0 0
    %795 = vmatpush1.bf16.msra.mxu0 0
    %796 = vmatprep.subr.bf16.mxu0 0
    %797 = vmatpush1.bf16.msra.mxu0 0
    %798 = vmatprep.mubr.bf16.mxu0 0
    %799 = vmatmul.mubr.bf16.gmra.mrb[0].mxu0 %v723
    %v800 = vpop.f32.mrb[0].mxu0
    %v801 = vadd.f32 0.0, %v800
    %v802 = vpop.f32.mrb[0].mxu0
    %v803 = vpop.f32.mrb[0].mxu0
    %v804 = vpop.f32.mrb[0].mxu0
    %805 = vdwg.mxu0
    %v806 = vadd.f32 %v147, %v801
    %v807 = vxor.u32 %v806, 2147483648
    %v808 = vmul.f32 %v807, 1.442695
    %v809 = vpow.pop %v808
    %v810 = vadd.f32 %v809, 1.0
    %v811 = vrcp.pop %v810
    %v812 = vmul.f32 1.0, %v811
    %v813 = vtanh.pop %v806
    %v814 = vmul.f32 %v812, %v711
    %816 = vrot.lane.b32.xlu0 %v813, 64
    %v817 = vpop.permute.xlu0 %816
    %v819 = vmul.f32 %v812, %v817
    %821 = vrot.lane.b32.xlu0 %v819, 32
    %v822 = vpop.permute.xlu0 %821
    %v824 = vadd.f32 %v814, %v822
    %v825 = vtanh.pop %v824
    %827 = vrot.lane.b32.xlu0 %v825, 64
    %v828 = vpop.permute.xlu0 %827
    %v830 = vmul.f32 %v812, %v828
    %v831 = vpack.c.bf16 %v830, %v830
    %833 = vrot.lane.b32.xlu0 %v831, 32
    %v834 = vpop.permute.xlu0 %833
    %v836 = vsel %vm179, %v834, 0
    %838 = vmatprep.subr.bf16.mxu0 0
    %839 = vmatpush1.bf16.msra.mxu0 %v266
    %840 = vmatprep.subr.bf16.mxu0 0
    %841 = vmatpush1.bf16.msra.mxu0 %v267
    %842 = vmatprep.subr.bf16.mxu0 0
    %843 = vmatpush1.bf16.msra.mxu0 0
    %844 = vmatprep.subr.bf16.mxu0 0
    %845 = vmatpush1.bf16.msra.mxu0 0
    %846 = vmatprep.subr.bf16.mxu0 0
    %847 = vmatpush1.bf16.msra.mxu0 0
    %848 = vmatprep.subr.bf16.mxu0 0
    %849 = vmatpush1.bf16.msra.mxu0 0
    %850 = vmatprep.subr.bf16.mxu0 0
    %851 = vmatpush1.bf16.msra.mxu0 0
    %852 = vmatprep.subr.bf16.mxu0 0
    %853 = vmatpush1.bf16.msra.mxu0 0
    %854 = vmatprep.subr.bf16.mxu0 0
    %855 = vmatpush1.bf16.msra.mxu0 0
    %856 = vmatprep.subr.bf16.mxu0 0
    %857 = vmatpush1.bf16.msra.mxu0 0
    %858 = vmatprep.subr.bf16.mxu0 0
    %859 = vmatpush1.bf16.msra.mxu0 0
    %860 = vmatprep.subr.bf16.mxu0 0
    %861 = vmatpush1.bf16.msra.mxu0 0
    %862 = vmatprep.subr.bf16.mxu0 0
    %863 = vmatpush1.bf16.msra.mxu0 0
    %864 = vmatprep.subr.bf16.mxu0 0
    %865 = vmatpush1.bf16.msra.mxu0 0
    %866 = vmatprep.subr.bf16.mxu0 0
    %867 = vmatpush1.bf16.msra.mxu0 0
    %868 = vmatprep.subr.bf16.mxu0 0
    %869 = vmatpush1.bf16.msra.mxu0 0
    %870 = vmatprep.mubr.bf16.mxu0 0
    %871 = vmatmul.mubr.bf16.gmra.mrb[0].mxu0 %v836
    %v872 = vpop.f32.mrb[0].mxu0
    %v873 = vadd.f32 %v253, %v872
    %v874 = vpop.f32.mrb[0].mxu0
    %v875 = vpop.f32.mrb[0].mxu0
    %v876 = vpop.f32.mrb[0].mxu0
    %877 = vdwg.mxu0
    %878 = vst [vmem:[#allocation2 + $0x28] sm:$0xff] %v873
    %879 = vmatprep.subr.bf16.mxu0 0
    %880 = vmatpush1.bf16.msra.mxu0 %v175
    %881 = vmatprep.subr.bf16.mxu0 0
    %882 = vmatpush1.bf16.msra.mxu0 %v176
    %883 = vmatprep.subr.bf16.mxu0 0
    %884 = vmatpush1.bf16.msra.mxu0 0
    %885 = vmatprep.subr.bf16.mxu0 0
    %886 = vmatpush1.bf16.msra.mxu0 0
    %887 = vmatprep.subr.bf16.mxu0 0
    %888 = vmatpush1.bf16.msra.mxu0 0
    %889 = vmatprep.subr.bf16.mxu0 0
    %890 = vmatpush1.bf16.msra.mxu0 0
    %891 = vmatprep.subr.bf16.mxu0 0
    %892 = vmatpush1.bf16.msra.mxu0 0
    %893 = vmatprep.subr.bf16.mxu0 0
    %894 = vmatpush1.bf16.msra.mxu0 0
    %895 = vmatprep.subr.bf16.mxu0 0
    %896 = vmatpush1.bf16.msra.mxu0 0
    %897 = vmatprep.subr.bf16.mxu0 0
    %898 = vmatpush1.bf16.msra.mxu0 0
    %899 = vmatprep.subr.bf16.mxu0 0
    %900 = vmatpush1.bf16.msra.mxu0 0
    %901 = vmatprep.subr.bf16.mxu0 0
    %902 = vmatpush1.bf16.msra.mxu0 0
    %903 = vmatprep.subr.bf16.mxu0 0
    %904 = vmatpush1.bf16.msra.mxu0 0
    %905 = vmatprep.subr.bf16.mxu0 0
    %906 = vmatpush1.bf16.msra.mxu0 0
    %907 = vmatprep.subr.bf16.mxu0 0
    %908 = vmatpush1.bf16.msra.mxu0 0
    %909 = vmatprep.subr.bf16.mxu0 0
    %910 = vmatpush1.bf16.msra.mxu0 0
    %911 = vmatprep.mubr.bf16.mxu0 0
    %912 = vmatmul.mubr.bf16.gmra.mrb[0].mxu0 %v836
    %v913 = vpop.f32.mrb[0].mxu0
    %v914 = vadd.f32 0.0, %v913
    %v915 = vpop.f32.mrb[0].mxu0
    %v916 = vpop.f32.mrb[0].mxu0
    %v917 = vpop.f32.mrb[0].mxu0
    %918 = vdwg.mxu0
    %v919 = vadd.f32 %v152, %v914
    %v920 = vxor.u32 %v919, 2147483648
    %v921 = vmul.f32 %v920, 1.442695
    %v922 = vpow.pop %v921
    %v923 = vadd.f32 %v922, 1.0
    %v924 = vrcp.pop %v923
    %v925 = vmul.f32 1.0, %v924
    %v926 = vtanh.pop %v919
    %v927 = vmul.f32 %v925, %v824
    %929 = vrot.lane.b32.xlu0 %v926, 64
    %v930 = vpop.permute.xlu0 %929
    %v932 = vmul.f32 %v925, %v930
    %934 = vrot.lane.b32.xlu0 %v932, 32
    %v935 = vpop.permute.xlu0 %934
    %v937 = vadd.f32 %v927, %v935
    %v938 = vtanh.pop %v937
    %940 = vrot.lane.b32.xlu0 %v938, 64
    %v941 = vpop.permute.xlu0 %940
    %v943 = vmul.f32 %v925, %v941
    %v944 = vpack.c.bf16 %v943, %v943
    %946 = vrot.lane.b32.xlu0 %v944, 32
    %v947 = vpop.permute.xlu0 %946
    %v949 = vsel %vm179, %v947, 0
    %951 = vmatprep.subr.bf16.mxu0 0
    %952 = vmatpush1.bf16.msra.mxu0 %v266
    %953 = vmatprep.subr.bf16.mxu0 0
    %954 = vmatpush1.bf16.msra.mxu0 %v267
    %955 = vmatprep.subr.bf16.mxu0 0
    %956 = vmatpush1.bf16.msra.mxu0 0
    %957 = vmatprep.subr.bf16.mxu0 0
    %958 = vmatpush1.bf16.msra.mxu0 0
    %959 = vmatprep.subr.bf16.mxu0 0
    %960 = vmatpush1.bf16.msra.mxu0 0
    %961 = vmatprep.subr.bf16.mxu0 0
    %962 = vmatpush1.bf16.msra.mxu0 0
    %963 = vmatprep.subr.bf16.mxu0 0
    %964 = vmatpush1.bf16.msra.mxu0 0
    %965 = vmatprep.subr.bf16.mxu0 0
    %966 = vmatpush1.bf16.msra.mxu0 0
    %967 = vmatprep.subr.bf16.mxu0 0
    %968 = vmatpush1.bf16.msra.mxu0 0
    %969 = vmatprep.subr.bf16.mxu0 0
    %970 = vmatpush1.bf16.msra.mxu0 0
    %971 = vmatprep.subr.bf16.mxu0 0
    %972 = vmatpush1.bf16.msra.mxu0 0
    %973 = vmatprep.subr.bf16.mxu0 0
    %974 = vmatpush1.bf16.msra.mxu0 0
    %975 = vmatprep.subr.bf16.mxu0 0
    %976 = vmatpush1.bf16.msra.mxu0 0
    %977 = vmatprep.subr.bf16.mxu0 0
    %978 = vmatpush1.bf16.msra.mxu0 0
    %979 = vmatprep.subr.bf16.mxu0 0
    %980 = vmatpush1.bf16.msra.mxu0 0
    %981 = vmatprep.subr.bf16.mxu0 0
    %982 = vmatpush1.bf16.msra.mxu0 0
    %983 = vmatprep.mubr.bf16.mxu0 0
    %984 = vmatmul.mubr.bf16.gmra.mrb[0].mxu0 %v949
    %v985 = vpop.f32.mrb[0].mxu0
    %v986 = vadd.f32 %v253, %v985
    %v987 = vpop.f32.mrb[0].mxu0
    %v988 = vpop.f32.mrb[0].mxu0
    %v989 = vpop.f32.mrb[0].mxu0
    %990 = vdwg.mxu0
    %991 = vst [vmem:[#allocation2 + $0x30] sm:$0xff] %v986
    %992 = vmatprep.subr.bf16.mxu0 0
    %993 = vmatpush1.bf16.msra.mxu0 %v175
    %994 = vmatprep.subr.bf16.mxu0 0
    %995 = vmatpush1.bf16.msra.mxu0 %v176
    %996 = vmatprep.subr.bf16.mxu0 0
    %997 = vmatpush1.bf16.msra.mxu0 0
    %998 = vmatprep.subr.bf16.mxu0 0
    %999 = vmatpush1.bf16.msra.mxu0 0
    %1000 = vmatprep.subr.bf16.mxu0 0
    %1001 = vmatpush1.bf16.msra.mxu0 0
    %1002 = vmatprep.subr.bf16.mxu0 0
    %1003 = vmatpush1.bf16.msra.mxu0 0
    %1004 = vmatprep.subr.bf16.mxu0 0
    %1005 = vmatpush1.bf16.msra.mxu0 0
    %1006 = vmatprep.subr.bf16.mxu0 0
    %1007 = vmatpush1.bf16.msra.mxu0 0
    %1008 = vmatprep.subr.bf16.mxu0 0
    %1009 = vmatpush1.bf16.msra.mxu0 0
    %1010 = vmatprep.subr.bf16.mxu0 0
    %1011 = vmatpush1.bf16.msra.mxu0 0
    %1012 = vmatprep.subr.bf16.mxu0 0
    %1013 = vmatpush1.bf16.msra.mxu0 0
    %1014 = vmatprep.subr.bf16.mxu0 0
    %1015 = vmatpush1.bf16.msra.mxu0 0
    %1016 = vmatprep.subr.bf16.mxu0 0
    %1017 = vmatpush1.bf16.msra.mxu0 0
    %1018 = vmatprep.subr.bf16.mxu0 0
    %1019 = vmatpush1.bf16.msra.mxu0 0
    %1020 = vmatprep.subr.bf16.mxu0 0
    %1021 = vmatpush1.bf16.msra.mxu0 0
    %1022 = vmatprep.subr.bf16.mxu0 0
    %1023 = vmatpush1.bf16.msra.mxu0 0
    %1024 = vmatprep.mubr.bf16.mxu0 0
    %1025 = vmatmul.mubr.bf16.gmra.mrb[0].mxu0 %v949
    %v1026 = vpop.f32.mrb[0].mxu0
    %v1027 = vadd.f32 0.0, %v1026
    %v1028 = vpop.f32.mrb[0].mxu0
    %v1029 = vpop.f32.mrb[0].mxu0
    %v1030 = vpop.f32.mrb[0].mxu0
    %1031 = vdwg.mxu0
    %v1032 = vadd.f32 %v155, %v1027
    %v1033 = vxor.u32 %v1032, 2147483648
    %v1034 = vmul.f32 %v1033, 1.442695
    %v1035 = vpow.pop %v1034
    %v1036 = vadd.f32 %v1035, 1.0
    %v1037 = vrcp.pop %v1036
    %v1038 = vmul.f32 1.0, %v1037
    %v1039 = vtanh.pop %v1032
    %v1040 = vmul.f32 %v1038, %v937
    %1042 = vrot.lane.b32.xlu0 %v1039, 64
    %v1043 = vpop.permute.xlu0 %1042
    %v1045 = vmul.f32 %v1038, %v1043
    %1047 = vrot.lane.b32.xlu0 %v1045, 32
    %v1048 = vpop.permute.xlu0 %1047
    %v1050 = vadd.f32 %v1040, %v1048
    %v1051 = vtanh.pop %v1050
    %1053 = vrot.lane.b32.xlu0 %v1051, 64
    %v1054 = vpop.permute.xlu0 %1053
    %v1056 = vmul.f32 %v1038, %v1054
    %v1057 = vpack.c.bf16 %v1056, %v1056
    %1059 = vrot.lane.b32.xlu0 %v1057, 32
    %v1060 = vpop.permute.xlu0 %1059
    %v1062 = vsel %vm179, %v1060, 0
    %1064 = vmatprep.subr.bf16.mxu0 0
    %1065 = vmatpush1.bf16.msra.mxu0 %v266
    %1066 = vmatprep.subr.bf16.mxu0 0
    %1067 = vmatpush1.bf16.msra.mxu0 %v267
    %1068 = vmatprep.subr.bf16.mxu0 0
    %1069 = vmatpush1.bf16.msra.mxu0 0
    %1070 = vmatprep.subr.bf16.mxu0 0
    %1071 = vmatpush1.bf16.msra.mxu0 0
    %1072 = vmatprep.subr.bf16.mxu0 0
    %1073 = vmatpush1.bf16.msra.mxu0 0
    %1074 = vmatprep.subr.bf16.mxu0 0
    %1075 = vmatpush1.bf16.msra.mxu0 0
    %1076 = vmatprep.subr.bf16.mxu0 0
    %1077 = vmatpush1.bf16.msra.mxu0 0
    %1078 = vmatprep.subr.bf16.mxu0 0
    %1079 = vmatpush1.bf16.msra.mxu0 0
    %1080 = vmatprep.subr.bf16.mxu0 0
    %1081 = vmatpush1.bf16.msra.mxu0 0
    %1082 = vmatprep.subr.bf16.mxu0 0
    %1083 = vmatpush1.bf16.msra.mxu0 0
    %1084 = vmatprep.subr.bf16.mxu0 0
    %1085 = vmatpush1.bf16.msra.mxu0 0
    %1086 = vmatprep.subr.bf16.mxu0 0
    %1087 = vmatpush1.bf16.msra.mxu0 0
    %1088 = vmatprep.subr.bf16.mxu0 0
    %1089 = vmatpush1.bf16.msra.mxu0 0
    %1090 = vmatprep.subr.bf16.mxu0 0
    %1091 = vmatpush1.bf16.msra.mxu0 0
    %1092 = vmatprep.subr.bf16.mxu0 0
    %1093 = vmatpush1.bf16.msra.mxu0 0
    %1094 = vmatprep.subr.bf16.mxu0 0
    %1095 = vmatpush1.bf16.msra.mxu0 0
    %1096 = vmatprep.mubr.bf16.mxu0 0
    %1097 = vmatmul.mubr.bf16.gmra.mrb[0].mxu0 %v1062
    %v1098 = vpop.f32.mrb[0].mxu0
    %v1099 = vadd.f32 %v253, %v1098
    %v1100 = vpop.f32.mrb[0].mxu0
    %v1101 = vpop.f32.mrb[0].mxu0
    %v1102 = vpop.f32.mrb[0].mxu0
    %1103 = vdwg.mxu0
    %1104 = vst [vmem:[#allocation2 + $0x38] sm:$0xff] %v1099
    %v1105 = vld [vmem:[%s5] sm:$0xf]
    %v1106 = vld [vmem:[%s5 + $0x4] sm:$0xf]
    %v1107 = vld [vmem:[%s5 + $0x8] sm:$0xf]
    %v1108 = vld [vmem:[%s5 + $0xc] sm:$0xf]
    %v1109 = vld [vmem:[#allocation2] sm:$0xff]
    %v1114 = vunpack.c.l.b16 %v1105
    %v1115 = vunpack.c.l.b16 %v1106
    %v1116 = vunpack.c.l.b16 %v1107
    %v1117 = vunpack.c.l.b16 %v1108
    %v1118 = vpack.c.b16 %v1115, %v1114
    %v1119 = vpack.c.b16 %v1117, %v1116
    %1122 = vmatprep.subr.bf16.mxu0 0
    %1123 = vmatpush1.bf16.msra.mxu0 %v1118
    %1124 = vmatprep.subr.bf16.mxu0 0
    %1125 = vmatpush1.bf16.msra.mxu0 %v1119
    %1126 = vmatprep.subr.bf16.mxu0 0
    %1127 = vmatpush1.bf16.msra.mxu0 0
    %1128 = vmatprep.subr.bf16.mxu0 0
    %1129 = vmatpush1.bf16.msra.mxu0 0
    %1130 = vmatprep.subr.bf16.mxu0 0
    %1131 = vmatpush1.bf16.msra.mxu0 0
    %1132 = vmatprep.subr.bf16.mxu0 0
    %1133 = vmatpush1.bf16.msra.mxu0 0
    %1134 = vmatprep.subr.bf16.mxu0 0
    %1135 = vmatpush1.bf16.msra.mxu0 0
    %1136 = vmatprep.subr.bf16.mxu0 0
    %1137 = vmatpush1.bf16.msra.mxu0 0
    %1138 = vmatprep.subr.bf16.mxu0 0
    %1139 = vmatpush1.bf16.msra.mxu0 0
    %1140 = vmatprep.subr.bf16.mxu0 0
    %1141 = vmatpush1.bf16.msra.mxu0 0
    %1142 = vmatprep.subr.bf16.mxu0 0
    %1143 = vmatpush1.bf16.msra.mxu0 0
    %1144 = vmatprep.subr.bf16.mxu0 0
    %1145 = vmatpush1.bf16.msra.mxu0 0
    %1146 = vmatprep.subr.bf16.mxu0 0
    %1147 = vmatpush1.bf16.msra.mxu0 0
    %1148 = vmatprep.subr.bf16.mxu0 0
    %1149 = vmatpush1.bf16.msra.mxu0 0
    %1150 = vmatprep.subr.bf16.mxu0 0
    %1151 = vmatpush1.bf16.msra.mxu0 0
    %1152 = vmatprep.subr.bf16.mxu0 0
    %1153 = vmatpush1.bf16.msra.mxu0 0
    %1154 = vmatprep.mubr.bf16.mxu0 0
    %1155 = vmatmul.mubr.bf16.gmra.mrb[0].mxu0 %v181
    %v1156 = vpop.f32.mrb[0].mxu0
    %v1157 = vadd.f32 0.0, %v1156
    %v1158 = vpop.f32.mrb[0].mxu0
    %v1159 = vpop.f32.mrb[0].mxu0
    %v1160 = vpop.f32.mrb[0].mxu0
    %1161 = vdwg.mxu0
    %v1162 = vadd.f32 %v1109, %v1157
    %v1163 = vxor.u32 %v1162, 2147483648
    %v1164 = vmul.f32 %v1163, 1.442695
    %v1165 = vpow.pop %v1164
    %v1166 = vadd.f32 %v1165, 1.0
    %v1167 = vrcp.pop %v1166
    %v1168 = vmul.f32 1.0, %v1167
    %v1169 = vtanh.pop %v1162
    %v1170 = vmul.f32 %v1168, 0.0
    %1172 = vrot.lane.b32.xlu0 %v1169, 64
    %v1173 = vpop.permute.xlu0 %1172
    %v1175 = vmul.f32 %v1168, %v1173
    %1177 = vrot.lane.b32.xlu0 %v1175, 32
    %v1178 = vpop.permute.xlu0 %1177
    %v1180 = vadd.f32 %v1170, %v1178
    %v1181 = vtanh.pop %v1180
    %1183 = vrot.lane.b32.xlu0 %v1181, 64
    %v1184 = vpop.permute.xlu0 %1183
    %v1186 = vmul.f32 %v1168, %v1184
    %v1187 = vld [vmem:[#allocation2 + $0x8] sm:$0xff]
    %v1188 = vpack.c.bf16 %v1186, %v1186
    %1190 = vrot.lane.b32.xlu0 %v1188, 32
    %v1191 = vpop.permute.xlu0 %1190
    %v1193 = vsel %vm179, %v1191, 0
    %1195 = vmatprep.subr.bf16.mxu0 0
    %1196 = vmatpush1.bf16.msra.mxu0 %v1118
    %1197 = vmatprep.subr.bf16.mxu0 0
    %1198 = vmatpush1.bf16.msra.mxu0 %v1119
    %1199 = vmatprep.subr.bf16.mxu0 0
    %1200 = vmatpush1.bf16.msra.mxu0 0
    %1201 = vmatprep.subr.bf16.mxu0 0
    %1202 = vmatpush1.bf16.msra.mxu0 0
    %1203 = vmatprep.subr.bf16.mxu0 0
    %1204 = vmatpush1.bf16.msra.mxu0 0
    %1205 = vmatprep.subr.bf16.mxu0 0
    %1206 = vmatpush1.bf16.msra.mxu0 0
    %1207 = vmatprep.subr.bf16.mxu0 0
    %1208 = vmatpush1.bf16.msra.mxu0 0
    %1209 = vmatprep.subr.bf16.mxu0 0
    %1210 = vmatpush1.bf16.msra.mxu0 0
    %1211 = vmatprep.subr.bf16.mxu0 0
    %1212 = vmatpush1.bf16.msra.mxu0 0
    %1213 = vmatprep.subr.bf16.mxu0 0
    %1214 = vmatpush1.bf16.msra.mxu0 0
    %1215 = vmatprep.subr.bf16.mxu0 0
    %1216 = vmatpush1.bf16.msra.mxu0 0
    %1217 = vmatprep.subr.bf16.mxu0 0
    %1218 = vmatpush1.bf16.msra.mxu0 0
    %1219 = vmatprep.subr.bf16.mxu0 0
    %1220 = vmatpush1.bf16.msra.mxu0 0
    %1221 = vmatprep.subr.bf16.mxu0 0
    %1222 = vmatpush1.bf16.msra.mxu0 0
    %1223 = vmatprep.subr.bf16.mxu0 0
    %1224 = vmatpush1.bf16.msra.mxu0 0
    %1225 = vmatprep.subr.bf16.mxu0 0
    %1226 = vmatpush1.bf16.msra.mxu0 0
    %1227 = vmatprep.mubr.bf16.mxu0 0
    %1228 = vmatmul.mubr.bf16.gmra.mrb[0].mxu0 %v1193
    %v1229 = vpop.f32.mrb[0].mxu0
    %v1230 = vadd.f32 0.0, %v1229
    %v1231 = vpop.f32.mrb[0].mxu0
    %v1232 = vpop.f32.mrb[0].mxu0
    %v1233 = vpop.f32.mrb[0].mxu0
    %1234 = vdwg.mxu0
    %v1235 = vadd.f32 %v1187, %v1230
    %v1236 = vxor.u32 %v1235, 2147483648
    %v1237 = vmul.f32 %v1236, 1.442695
    %v1238 = vpow.pop %v1237
    %v1239 = vadd.f32 %v1238, 1.0
    %v1240 = vrcp.pop %v1239
    %v1241 = vmul.f32 1.0, %v1240
    %v1242 = vtanh.pop %v1235
    %v1243 = vmul.f32 %v1241, %v1180
    %1245 = vrot.lane.b32.xlu0 %v1242, 64
    %v1246 = vpop.permute.xlu0 %1245
    %v1248 = vmul.f32 %v1241, %v1246
    %1250 = vrot.lane.b32.xlu0 %v1248, 32
    %v1251 = vpop.permute.xlu0 %1250
    %v1253 = vadd.f32 %v1243, %v1251
    %v1254 = vtanh.pop %v1253
    %1256 = vrot.lane.b32.xlu0 %v1254, 64
    %v1257 = vpop.permute.xlu0 %1256
    %v1259 = vmul.f32 %v1241, %v1257
    %v1260 = vld [vmem:[#allocation2 + $0x10] sm:$0xff]
    %v1261 = vpack.c.bf16 %v1259, %v1259
    %1263 = vrot.lane.b32.xlu0 %v1261, 32
    %v1264 = vpop.permute.xlu0 %1263
    %v1266 = vsel %vm179, %v1264, 0
    %1268 = vmatprep.subr.bf16.mxu0 0
    %1269 = vmatpush1.bf16.msra.mxu0 %v1118
    %1270 = vmatprep.subr.bf16.mxu0 0
    %1271 = vmatpush1.bf16.msra.mxu0 %v1119
    %1272 = vmatprep.subr.bf16.mxu0 0
    %1273 = vmatpush1.bf16.msra.mxu0 0
    %1274 = vmatprep.subr.bf16.mxu0 0
    %1275 = vmatpush1.bf16.msra.mxu0 0
    %1276 = vmatprep.subr.bf16.mxu0 0
    %1277 = vmatpush1.bf16.msra.mxu0 0
    %1278 = vmatprep.subr.bf16.mxu0 0
    %1279 = vmatpush1.bf16.msra.mxu0 0
    %1280 = vmatprep.subr.bf16.mxu0 0
    %1281 = vmatpush1.bf16.msra.mxu0 0
    %1282 = vmatprep.subr.bf16.mxu0 0
    %1283 = vmatpush1.bf16.msra.mxu0 0
    %1284 = vmatprep.subr.bf16.mxu0 0
    %1285 = vmatpush1.bf16.msra.mxu0 0
    %1286 = vmatprep.subr.bf16.mxu0 0
    %1287 = vmatpush1.bf16.msra.mxu0 0
    %1288 = vmatprep.subr.bf16.mxu0 0
    %1289 = vmatpush1.bf16.msra.mxu0 0
    %1290 = vmatprep.subr.bf16.mxu0 0
    %1291 = vmatpush1.bf16.msra.mxu0 0
    %1292 = vmatprep.subr.bf16.mxu0 0
    %1293 = vmatpush1.bf16.msra.mxu0 0
    %1294 = vmatprep.subr.bf16.mxu0 0
    %1295 = vmatpush1.bf16.msra.mxu0 0
    %1296 = vmatprep.subr.bf16.mxu0 0
    %1297 = vmatpush1.bf16.msra.mxu0 0
    %1298 = vmatprep.subr.bf16.mxu0 0
    %1299 = vmatpush1.bf16.msra.mxu0 0
    %1300 = vmatprep.mubr.bf16.mxu0 0
    %1301 = vmatmul.mubr.bf16.gmra.mrb[0].mxu0 %v1266
    %v1302 = vpop.f32.mrb[0].mxu0
    %v1303 = vadd.f32 0.0, %v1302
    %v1304 = vpop.f32.mrb[0].mxu0
    %v1305 = vpop.f32.mrb[0].mxu0
    %v1306 = vpop.f32.mrb[0].mxu0
    %1307 = vdwg.mxu0
    %v1308 = vadd.f32 %v1260, %v1303
    %v1309 = vxor.u32 %v1308, 2147483648
    %v1310 = vmul.f32 %v1309, 1.442695
    %v1311 = vpow.pop %v1310
    %v1312 = vadd.f32 %v1311, 1.0
    %v1313 = vrcp.pop %v1312
    %v1314 = vmul.f32 1.0, %v1313
    %v1315 = vtanh.pop %v1308
    %v1316 = vmul.f32 %v1314, %v1253
    %1318 = vrot.lane.b32.xlu0 %v1315, 64
    %v1319 = vpop.permute.xlu0 %1318
    %v1321 = vmul.f32 %v1314, %v1319
    %1323 = vrot.lane.b32.xlu0 %v1321, 32
    %v1324 = vpop.permute.xlu0 %1323
    %v1326 = vadd.f32 %v1316, %v1324
    %v1327 = vtanh.pop %v1326
    %1329 = vrot.lane.b32.xlu0 %v1327, 64
    %v1330 = vpop.permute.xlu0 %1329
    %v1332 = vmul.f32 %v1314, %v1330
    %v1333 = vld [vmem:[#allocation2 + $0x18] sm:$0xff]
    %v1334 = vpack.c.bf16 %v1332, %v1332
    %1336 = vrot.lane.b32.xlu0 %v1334, 32
    %v1337 = vpop.permute.xlu0 %1336
    %v1339 = vsel %vm179, %v1337, 0
    %1341 = vmatprep.subr.bf16.mxu0 0
    %1342 = vmatpush1.bf16.msra.mxu0 %v1118
    %1343 = vmatprep.subr.bf16.mxu0 0
    %1344 = vmatpush1.bf16.msra.mxu0 %v1119
    %1345 = vmatprep.subr.bf16.mxu0 0
    %1346 = vmatpush1.bf16.msra.mxu0 0
    %1347 = vmatprep.subr.bf16.mxu0 0
    %1348 = vmatpush1.bf16.msra.mxu0 0
    %1349 = vmatprep.subr.bf16.mxu0 0
    %1350 = vmatpush1.bf16.msra.mxu0 0
    %1351 = vmatprep.subr.bf16.mxu0 0
    %1352 = vmatpush1.bf16.msra.mxu0 0
    %1353 = vmatprep.subr.bf16.mxu0 0
    %1354 = vmatpush1.bf16.msra.mxu0 0
    %1355 = vmatprep.subr.bf16.mxu0 0
    %1356 = vmatpush1.bf16.msra.mxu0 0
    %1357 = vmatprep.subr.bf16.mxu0 0
    %1358 = vmatpush1.bf16.msra.mxu0 0
    %1359 = vmatprep.subr.bf16.mxu0 0
    %1360 = vmatpush1.bf16.msra.mxu0 0
    %1361 = vmatprep.subr.bf16.mxu0 0
    %1362 = vmatpush1.bf16.msra.mxu0 0
    %1363 = vmatprep.subr.bf16.mxu0 0
    %1364 = vmatpush1.bf16.msra.mxu0 0
    %1365 = vmatprep.subr.bf16.mxu0 0
    %1366 = vmatpush1.bf16.msra.mxu0 0
    %1367 = vmatprep.subr.bf16.mxu0 0
    %1368 = vmatpush1.bf16.msra.mxu0 0
    %1369 = vmatprep.subr.bf16.mxu0 0
    %1370 = vmatpush1.bf16.msra.mxu0 0
    %1371 = vmatprep.subr.bf16.mxu0 0
    %1372 = vmatpush1.bf16.msra.mxu0 0
    %1373 = vmatprep.mubr.bf16.mxu0 0
    %1374 = vmatmul.mubr.bf16.gmra.mrb[0].mxu0 %v1339
    %v1375 = vpop.f32.mrb[0].mxu0
    %v1376 = vadd.f32 0.0, %v1375
    %v1377 = vpop.f32.mrb[0].mxu0
    %v1378 = vpop.f32.mrb[0].mxu0
    %v1379 = vpop.f32.mrb[0].mxu0
    %1380 = vdwg.mxu0
    %v1381 = vadd.f32 %v1333, %v1376
    %v1382 = vxor.u32 %v1381, 2147483648
    %v1383 = vmul.f32 %v1382, 1.442695
    %v1384 = vpow.pop %v1383
    %v1385 = vadd.f32 %v1384, 1.0
    %v1386 = vrcp.pop %v1385
    %v1387 = vmul.f32 1.0, %v1386
    %v1388 = vtanh.pop %v1381
    %v1389 = vmul.f32 %v1387, %v1326
    %1391 = vrot.lane.b32.xlu0 %v1388, 64
    %v1392 = vpop.permute.xlu0 %1391
    %v1394 = vmul.f32 %v1387, %v1392
    %1396 = vrot.lane.b32.xlu0 %v1394, 32
    %v1397 = vpop.permute.xlu0 %1396
    %v1399 = vadd.f32 %v1389, %v1397
    %v1400 = vtanh.pop %v1399
    %1402 = vrot.lane.b32.xlu0 %v1400, 64
    %v1403 = vpop.permute.xlu0 %1402
    %v1405 = vmul.f32 %v1387, %v1403
    %v1406 = vld [vmem:[#allocation2 + $0x20] sm:$0xff]
    %v1407 = vpack.c.bf16 %v1405, %v1405
    %1409 = vrot.lane.b32.xlu0 %v1407, 32
    %v1410 = vpop.permute.xlu0 %1409
    %v1412 = vsel %vm179, %v1410, 0
    %1414 = vmatprep.subr.bf16.mxu0 0
    %1415 = vmatpush1.bf16.msra.mxu0 %v1118
    %1416 = vmatprep.subr.bf16.mxu0 0
    %1417 = vmatpush1.bf16.msra.mxu0 %v1119
    %1418 = vmatprep.subr.bf16.mxu0 0
    %1419 = vmatpush1.bf16.msra.mxu0 0
    %1420 = vmatprep.subr.bf16.mxu0 0
    %1421 = vmatpush1.bf16.msra.mxu0 0
    %1422 = vmatprep.subr.bf16.mxu0 0
    %1423 = vmatpush1.bf16.msra.mxu0 0
    %1424 = vmatprep.subr.bf16.mxu0 0
    %1425 = vmatpush1.bf16.msra.mxu0 0
    %1426 = vmatprep.subr.bf16.mxu0 0
    %1427 = vmatpush1.bf16.msra.mxu0 0
    %1428 = vmatprep.subr.bf16.mxu0 0
    %1429 = vmatpush1.bf16.msra.mxu0 0
    %1430 = vmatprep.subr.bf16.mxu0 0
    %1431 = vmatpush1.bf16.msra.mxu0 0
    %1432 = vmatprep.subr.bf16.mxu0 0
    %1433 = vmatpush1.bf16.msra.mxu0 0
    %1434 = vmatprep.subr.bf16.mxu0 0
    %1435 = vmatpush1.bf16.msra.mxu0 0
    %1436 = vmatprep.subr.bf16.mxu0 0
    %1437 = vmatpush1.bf16.msra.mxu0 0
    %1438 = vmatprep.subr.bf16.mxu0 0
    %1439 = vmatpush1.bf16.msra.mxu0 0
    %1440 = vmatprep.subr.bf16.mxu0 0
    %1441 = vmatpush1.bf16.msra.mxu0 0
    %1442 = vmatprep.subr.bf16.mxu0 0
    %1443 = vmatpush1.bf16.msra.mxu0 0
    %1444 = vmatprep.subr.bf16.mxu0 0
    %1445 = vmatpush1.bf16.msra.mxu0 0
    %1446 = vmatprep.mubr.bf16.mxu0 0
    %1447 = vmatmul.mubr.bf16.gmra.mrb[0].mxu0 %v1412
    %v1448 = vpop.f32.mrb[0].mxu0
    %v1449 = vadd.f32 0.0, %v1448
    %v1450 = vpop.f32.mrb[0].mxu0
    %v1451 = vpop.f32.mrb[0].mxu0
    %v1452 = vpop.f32.mrb[0].mxu0
    %1453 = vdwg.mxu0
    %v1454 = vadd.f32 %v1406, %v1449
    %v1455 = vxor.u32 %v1454, 2147483648
    %v1456 = vmul.f32 %v1455, 1.442695
    %v1457 = vpow.pop %v1456
    %v1458 = vadd.f32 %v1457, 1.0
    %v1459 = vrcp.pop %v1458
    %v1460 = vmul.f32 1.0, %v1459
    %v1461 = vtanh.pop %v1454
    %v1462 = vmul.f32 %v1460, %v1399
    %1464 = vrot.lane.b32.xlu0 %v1461, 64
    %v1465 = vpop.permute.xlu0 %1464
    %v1467 = vmul.f32 %v1460, %v1465
    %1469 = vrot.lane.b32.xlu0 %v1467, 32
    %v1470 = vpop.permute.xlu0 %1469
    %v1472 = vadd.f32 %v1462, %v1470
    %v1473 = vtanh.pop %v1472
    %1475 = vrot.lane.b32.xlu0 %v1473, 64
    %v1476 = vpop.permute.xlu0 %1475
    %v1478 = vmul.f32 %v1460, %v1476
    %v1479 = vld [vmem:[#allocation2 + $0x28] sm:$0xff]
    %v1480 = vpack.c.bf16 %v1478, %v1478
    %1482 = vrot.lane.b32.xlu0 %v1480, 32
    %v1483 = vpop.permute.xlu0 %1482
    %v1485 = vsel %vm179, %v1483, 0
    %1487 = vmatprep.subr.bf16.mxu0 0
    %1488 = vmatpush1.bf16.msra.mxu0 %v1118
    %1489 = vmatprep.subr.bf16.mxu0 0
    %1490 = vmatpush1.bf16.msra.mxu0 %v1119
    %1491 = vmatprep.subr.bf16.mxu0 0
    %1492 = vmatpush1.bf16.msra.mxu0 0
    %1493 = vmatprep.subr.bf16.mxu0 0
    %1494 = vmatpush1.bf16.msra.mxu0 0
    %1495 = vmatprep.subr.bf16.mxu0 0
    %1496 = vmatpush1.bf16.msra.mxu0 0
    %1497 = vmatprep.subr.bf16.mxu0 0
    %1498 = vmatpush1.bf16.msra.mxu0 0
    %1499 = vmatprep.subr.bf16.mxu0 0
    %1500 = vmatpush1.bf16.msra.mxu0 0
    %1501 = vmatprep.subr.bf16.mxu0 0
    %1502 = vmatpush1.bf16.msra.mxu0 0
    %1503 = vmatprep.subr.bf16.mxu0 0
    %1504 = vmatpush1.bf16.msra.mxu0 0
    %1505 = vmatprep.subr.bf16.mxu0 0
    %1506 = vmatpush1.bf16.msra.mxu0 0
    %1507 = vmatprep.subr.bf16.mxu0 0
    %1508 = vmatpush1.bf16.msra.mxu0 0
    %1509 = vmatprep.subr.bf16.mxu0 0
    %1510 = vmatpush1.bf16.msra.mxu0 0
    %1511 = vmatprep.subr.bf16.mxu0 0
    %1512 = vmatpush1.bf16.msra.mxu0 0
    %1513 = vmatprep.subr.bf16.mxu0 0
    %1514 = vmatpush1.bf16.msra.mxu0 0
    %1515 = vmatprep.subr.bf16.mxu0 0
    %1516 = vmatpush1.bf16.msra.mxu0 0
    %1517 = vmatprep.subr.bf16.mxu0 0
    %1518 = vmatpush1.bf16.msra.mxu0 0
    %1519 = vmatprep.mubr.bf16.mxu0 0
    %1520 = vmatmul.mubr.bf16.gmra.mrb[0].mxu0 %v1485
    %v1521 = vpop.f32.mrb[0].mxu0
    %v1522 = vadd.f32 0.0, %v1521
    %v1523 = vpop.f32.mrb[0].mxu0
    %v1524 = vpop.f32.mrb[0].mxu0
    %v1525 = vpop.f32.mrb[0].mxu0
    %1526 = vdwg.mxu0
    %v1527 = vadd.f32 %v1479, %v1522
    %v1528 = vxor.u32 %v1527, 2147483648
    %v1529 = vmul.f32 %v1528, 1.442695
    %v1530 = vpow.pop %v1529
    %v1531 = vadd.f32 %v1530, 1.0
    %v1532 = vrcp.pop %v1531
    %v1533 = vmul.f32 1.0, %v1532
    %v1534 = vtanh.pop %v1527
    %v1535 = vmul.f32 %v1533, %v1472
    %1537 = vrot.lane.b32.xlu0 %v1534, 64
    %v1538 = vpop.permute.xlu0 %1537
    %v1540 = vmul.f32 %v1533, %v1538
    %1542 = vrot.lane.b32.xlu0 %v1540, 32
    %v1543 = vpop.permute.xlu0 %1542
    %v1545 = vadd.f32 %v1535, %v1543
    %v1546 = vtanh.pop %v1545
    %1548 = vrot.lane.b32.xlu0 %v1546, 64
    %v1549 = vpop.permute.xlu0 %1548
    %v1551 = vmul.f32 %v1533, %v1549
    %v1552 = vld [vmem:[#allocation2 + $0x30] sm:$0xff]
    %v1553 = vpack.c.bf16 %v1551, %v1551
    %1555 = vrot.lane.b32.xlu0 %v1553, 32
    %v1556 = vpop.permute.xlu0 %1555
    %v1558 = vsel %vm179, %v1556, 0
    %1560 = vmatprep.subr.bf16.mxu0 0
    %1561 = vmatpush1.bf16.msra.mxu0 %v1118
    %1562 = vmatprep.subr.bf16.mxu0 0
    %1563 = vmatpush1.bf16.msra.mxu0 %v1119
    %1564 = vmatprep.subr.bf16.mxu0 0
    %1565 = vmatpush1.bf16.msra.mxu0 0
    %1566 = vmatprep.subr.bf16.mxu0 0
    %1567 = vmatpush1.bf16.msra.mxu0 0
    %1568 = vmatprep.subr.bf16.mxu0 0
    %1569 = vmatpush1.bf16.msra.mxu0 0
    %1570 = vmatprep.subr.bf16.mxu0 0
    %1571 = vmatpush1.bf16.msra.mxu0 0
    %1572 = vmatprep.subr.bf16.mxu0 0
    %1573 = vmatpush1.bf16.msra.mxu0 0
    %1574 = vmatprep.subr.bf16.mxu0 0
    %1575 = vmatpush1.bf16.msra.mxu0 0
    %1576 = vmatprep.subr.bf16.mxu0 0
    %1577 = vmatpush1.bf16.msra.mxu0 0
    %1578 = vmatprep.subr.bf16.mxu0 0
    %1579 = vmatpush1.bf16.msra.mxu0 0
    %1580 = vmatprep.subr.bf16.mxu0 0
    %1581 = vmatpush1.bf16.msra.mxu0 0
    %1582 = vmatprep.subr.bf16.mxu0 0
    %1583 = vmatpush1.bf16.msra.mxu0 0
    %1584 = vmatprep.subr.bf16.mxu0 0
    %1585 = vmatpush1.bf16.msra.mxu0 0
    %1586 = vmatprep.subr.bf16.mxu0 0
    %1587 = vmatpush1.bf16.msra.mxu0 0
    %1588 = vmatprep.subr.bf16.mxu0 0
    %1589 = vmatpush1.bf16.msra.mxu0 0
    %1590 = vmatprep.subr.bf16.mxu0 0
    %1591 = vmatpush1.bf16.msra.mxu0 0
    %1592 = vmatprep.mubr.bf16.mxu0 0
    %1593 = vmatmul.mubr.bf16.gmra.mrb[0].mxu0 %v1558
    %v1594 = vpop.f32.mrb[0].mxu0
    %v1595 = vadd.f32 0.0, %v1594
    %v1596 = vpop.f32.mrb[0].mxu0
    %v1597 = vpop.f32.mrb[0].mxu0
    %v1598 = vpop.f32.mrb[0].mxu0
    %1599 = vdwg.mxu0
    %v1600 = vadd.f32 %v1552, %v1595
    %v1601 = vxor.u32 %v1600, 2147483648
    %v1602 = vmul.f32 %v1601, 1.442695
    %v1603 = vpow.pop %v1602
    %v1604 = vadd.f32 %v1603, 1.0
    %v1605 = vrcp.pop %v1604
    %v1606 = vmul.f32 1.0, %v1605
    %v1607 = vtanh.pop %v1600
    %v1608 = vmul.f32 %v1606, %v1545
    %1610 = vrot.lane.b32.xlu0 %v1607, 64
    %v1611 = vpop.permute.xlu0 %1610
    %v1613 = vmul.f32 %v1606, %v1611
    %1615 = vrot.lane.b32.xlu0 %v1613, 32
    %v1616 = vpop.permute.xlu0 %1615
    %v1618 = vadd.f32 %v1608, %v1616
    %v1619 = vtanh.pop %v1618
    %1621 = vrot.lane.b32.xlu0 %v1619, 64
    %v1622 = vpop.permute.xlu0 %1621
    %v1624 = vmul.f32 %v1606, %v1622
    %v1625 = vld [vmem:[#allocation2 + $0x38] sm:$0xff]
    %v1626 = vpack.c.bf16 %v1624, %v1624
    %1628 = vrot.lane.b32.xlu0 %v1626, 32
    %v1629 = vpop.permute.xlu0 %1628
    %v1631 = vsel %vm179, %v1629, 0
    %1633 = vmatprep.subr.bf16.mxu0 0
    %1634 = vmatpush1.bf16.msra.mxu0 %v1118
    %1635 = vmatprep.subr.bf16.mxu0 0
    %1636 = vmatpush1.bf16.msra.mxu0 %v1119
    %1637 = vmatprep.subr.bf16.mxu0 0
    %1638 = vmatpush1.bf16.msra.mxu0 0
    %1639 = vmatprep.subr.bf16.mxu0 0
    %1640 = vmatpush1.bf16.msra.mxu0 0
    %1641 = vmatprep.subr.bf16.mxu0 0
    %1642 = vmatpush1.bf16.msra.mxu0 0
    %1643 = vmatprep.subr.bf16.mxu0 0
    %1644 = vmatpush1.bf16.msra.mxu0 0
    %1645 = vmatprep.subr.bf16.mxu0 0
    %1646 = vmatpush1.bf16.msra.mxu0 0
    %1647 = vmatprep.subr.bf16.mxu0 0
    %1648 = vmatpush1.bf16.msra.mxu0 0
    %1649 = vmatprep.subr.bf16.mxu0 0
    %1650 = vmatpush1.bf16.msra.mxu0 0
    %1651 = vmatprep.subr.bf16.mxu0 0
    %1652 = vmatpush1.bf16.msra.mxu0 0
    %1653 = vmatprep.subr.bf16.mxu0 0
    %1654 = vmatpush1.bf16.msra.mxu0 0
    %1655 = vmatprep.subr.bf16.mxu0 0
    %1656 = vmatpush1.bf16.msra.mxu0 0
    %1657 = vmatprep.subr.bf16.mxu0 0
    %1658 = vmatpush1.bf16.msra.mxu0 0
    %1659 = vmatprep.subr.bf16.mxu0 0
    %1660 = vmatpush1.bf16.msra.mxu0 0
    %1661 = vmatprep.subr.bf16.mxu0 0
    %1662 = vmatpush1.bf16.msra.mxu0 0
    %1663 = vmatprep.subr.bf16.mxu0 0
    %1664 = vmatpush1.bf16.msra.mxu0 0
    %1665 = vmatprep.mubr.bf16.mxu0 0
    %1666 = vmatmul.mubr.bf16.gmra.mrb[0].mxu0 %v1631
    %v1667 = vpop.f32.mrb[0].mxu0
    %v1668 = vadd.f32 0.0, %v1667
    %v1669 = vpop.f32.mrb[0].mxu0
    %v1670 = vpop.f32.mrb[0].mxu0
    %v1671 = vpop.f32.mrb[0].mxu0
    %1672 = vdwg.mxu0
    %v1673 = vadd.f32 %v1625, %v1668
    %v1674 = vxor.u32 %v1673, 2147483648
    %v1675 = vmul.f32 %v1674, 1.442695
    %v1676 = vpow.pop %v1675
    %v1677 = vadd.f32 %v1676, 1.0
    %v1678 = vrcp.pop %v1677
    %v1679 = vmul.f32 1.0, %v1678
    %v1680 = vtanh.pop %v1673
    %v1681 = vmul.f32 %v1679, %v1618
    %1683 = vrot.lane.b32.xlu0 %v1680, 64
    %v1684 = vpop.permute.xlu0 %1683
    %v1686 = vmul.f32 %v1679, %v1684
    %1688 = vrot.lane.b32.xlu0 %v1686, 32
    %v1689 = vpop.permute.xlu0 %1688
    %v1691 = vadd.f32 %v1681, %v1689
    %v1692 = vtanh.pop %v1691
    %1694 = vrot.lane.b32.xlu0 %v1692, 64
    %v1695 = vpop.permute.xlu0 %1694
    %v1697 = vmul.f32 %v1679, %v1695
    %v1698 = vld [vmem:[%s7] sm:$0xff]
    %1700 = vset.pattern.permute.xlu0 0
    %1701 = vperm.xlu0 %1700, %v1698
    %v1702 = vpop.permute.xlu0 %1701
    %v1704 = vmul.f32 %v1697, %v1702
    %v1705 = vpack.c.bf16 %v1704, %v1704
    %v1706 = vld [vmem:[%s8] sm:$0xf]
    %v1707 = vld [vmem:[%s8 + $0x4] sm:$0xf]
    %v1708 = vld [vmem:[%s8 + $0x8] sm:$0xf]
    %v1709 = vld [vmem:[%s8 + $0xc] sm:$0xf]
    %v1710 = vld [vmem:[%s9] sm:$0x1]
    %v1712 = vlaneseq
    %v1713 = vshrl.u32 %v1712, 7
    %v1714 = vsub.s32 0, %v1713
    %v1715 = vrot.slane %v1710, %v1714
    %1718 = vrot.lane.b32.xlu0 %v1705, 32
    %v1719 = vpop.permute.xlu0 %1718
    %v1724 = vunpack.c.l.b16 %v1706
    %v1725 = vunpack.c.l.b16 %v1707
    %v1726 = vunpack.c.l.b16 %v1708
    %v1727 = vunpack.c.l.b16 %v1709
    %v1728 = vpack.c.b16 %v1725, %v1724
    %v1729 = vpack.c.b16 %v1727, %v1726
    %v1733 = vsel %vm179, %v1719, 0
    %1735 = vmatprep.subr.bf16.mxu0 0
    %1736 = vmatpush1.bf16.msra.mxu0 %v1728
    %1737 = vmatprep.subr.bf16.mxu0 0
    %1738 = vmatpush1.bf16.msra.mxu0 %v1729
    %1739 = vmatprep.subr.bf16.mxu0 0
    %1740 = vmatpush1.bf16.msra.mxu0 0
    %1741 = vmatprep.subr.bf16.mxu0 0
    %1742 = vmatpush1.bf16.msra.mxu0 0
    %1743 = vmatprep.subr.bf16.mxu0 0
    %1744 = vmatpush1.bf16.msra.mxu0 0
    %1745 = vmatprep.subr.bf16.mxu0 0
    %1746 = vmatpush1.bf16.msra.mxu0 0
    %1747 = vmatprep.subr.bf16.mxu0 0
    %1748 = vmatpush1.bf16.msra.mxu0 0
    %1749 = vmatprep.subr.bf16.mxu0 0
    %1750 = vmatpush1.bf16.msra.mxu0 0
    %1751 = vmatprep.subr.bf16.mxu0 0
    %1752 = vmatpush1.bf16.msra.mxu0 0
    %1753 = vmatprep.subr.bf16.mxu0 0
    %1754 = vmatpush1.bf16.msra.mxu0 0
    %1755 = vmatprep.subr.bf16.mxu0 0
    %1756 = vmatpush1.bf16.msra.mxu0 0
    %1757 = vmatprep.subr.bf16.mxu0 0
    %1758 = vmatpush1.bf16.msra.mxu0 0
    %1759 = vmatprep.subr.bf16.mxu0 0
    %1760 = vmatpush1.bf16.msra.mxu0 0
    %1761 = vmatprep.subr.bf16.mxu0 0
    %1762 = vmatpush1.bf16.msra.mxu0 0
    %1763 = vmatprep.subr.bf16.mxu0 0
    %1764 = vmatpush1.bf16.msra.mxu0 0
    %1765 = vmatprep.subr.bf16.mxu0 0
    %1766 = vmatpush1.bf16.msra.mxu0 0
    %1767 = vmatprep.mubr.bf16.mxu0 0
    %1768 = vmatmul.mubr.bf16.gmra.mrb[0].mxu0 %v1733
    %v1769 = vpop.f32.mrb[0].mxu0
    %v1770 = vadd.f32 %v1715, %v1769
    %v1771 = vpop.f32.mrb[0].mxu0
    %v1772 = vpop.f32.mrb[0].mxu0
    %v1773 = vpop.f32.mrb[0].mxu0
    %1774 = vdwg.mxu0
    %1775 = vst [vmem:[#allocation3] sm:$0xff] %v1770
    // Predicated region
    $region42: #{lstm_forward.1} parent=1 // pred_check
      _
    $region43: #{lstm_forward.1} parent=1 // pred_check_branch
      %1777 = sbr.rel (0) target = $region45
    $region44: #{lstm_forward.1} parent=1 // pred_region
      %s1779 = ssub.s32 128, 128
      %1780 = vsyncadd [#allocation4], %s1779
      %s1782 = sshll.u32 [#allocation3], 4
      %s1783 = int_to_ptr.vmem [resolvable:$true] %s1782
      %1785 = dma.vmem_to_hbm [thread:$0]  %s1783, 128, %s10, [#allocation4]
    $region45: #{lstm_forward.1} parent=1 // pred_fallthru
      _
    // Predicated region
    $region46: #{lstm_forward.1} parent=1 // pred_check
      _
    $region47: #{lstm_forward.1} parent=1 // pred_check_branch
      %1787 = sbr.rel (0) target = $region49
    $region48: #{lstm_forward.1} parent=1 // pred_region
      %1788 = dma.done [#allocation4], 128
    $region49: #{lstm_forward.1} parent=1 // pred_fallthru
      _
    %1789 = vsyncpa [#allocation4], 1

</llo_original>
